<compile_context>
chip_gen: v6e
topology: v6e:2x2x1
jax: 0.10.0
libtpu: 0.0.40
codegen_flags: <defaults>
</compile_context>

<pallas_src>
import functools

import jax
import jax.numpy as jnp
import numpy as np
from jax.experimental import pallas as pl
from jax.experimental.pallas import tpu as pltpu


# ---------------------- fused wavefront LSTM stack + fc kernel ----------------------
def make_wavefront_lstm_fc_kernel(num_layers, S, B_pad, H):
    """x(S*B_pad, D) -> num_layers x LSTM (wavefront) -> fc -> out(S*B_pad, O_pad)."""
    L = num_layers
    H3 = 3 * H

    def kernel(*refs):
        # refs = [x, (w_ih^T, w_hh^T, bias) * L, fc_w, fc_b, out, seq_scratch]
        x_ref = refs[0]
        idx = 1
        layer_refs = []
        for _ in range(L):
            layer_refs.append((refs[idx], refs[idx + 1], refs[idx + 2]))
            idx += 3
        fcw_ref = refs[idx]
        fcb_ref = refs[idx + 1]
        out_ref = refs[idx + 2]
        seq_scr = refs[idx + 3]                    # (S*B_pad, H) last-layer h sequence

        # Load every weight once as a value: the wavefront below is a fully
        # unrolled static trace, so these stay live in vregs and the MXU RHS
        # loads can be hoisted out of the recurrence.
        wih = [r[...] for (r, _, _) in layer_refs]     # (in_d|H, 4H) bf16
        whh = [r[...] for (_, r, _) in layer_refs]     # (H, 4H)      bf16
        bias = [r[...] for (_, _, r) in layer_refs]    # (1, 4H)      f32

        # Hoisted layer-0 input projection (+ combined bias) for ALL timesteps:
        # one (S*B_pad, D) @ (D, 4H) GEMM, completely off the serial chain.
        x_bf = x_ref[...].astype(jnp.bfloat16)
        proj0 = jnp.dot(x_bf, wih[0], preferred_element_type=jnp.float32) + bias[0]

        h = [jnp.zeros((B_pad, H), jnp.float32) for _ in range(L)]
        c = [jnp.zeros((B_pad, H), jnp.float32) for _ in range(L)]

        def cell(gates, c_prev):
            # Gate column order [i, f, o, g]: one contiguous sigmoid over 3H
            # lanes + one tanh over the last H lanes (EUP slot), no redundant
            # full-slab transcendentals.
            sg = jax.nn.sigmoid(gates[:, :H3])
            g_g = jnp.tanh(gates[:, H3:])
            i_g = sg[:, 0:H]
            f_g = sg[:, H:2 * H]
            o_g = sg[:, 2 * H:H3]
            c_new = f_g * c_prev + i_g * g_g
            h_new = o_g * jnp.tanh(c_new)
            return h_new, c_new

        # Wavefront recurrence, statically unrolled (S and L are tiny) for
        # scheduler visibility.  Serial chain = S + L - 1 waves, not S*L steps.
        for wave in range(S + L - 1):
            for l in reversed(range(L)):
                t = wave - l
                if t < 0 or t >= S:
                    continue
                if l == 0:
                    # Aligned full-sublane-tile slice (B_pad == 8).
                    proj_t = proj0[t * B_pad:(t + 1) * B_pad, :]
                else:
                    # Per-step input projection from the layer-below output of
                    # the previous wave; issues into the MXU back-to-back with
                    # the recurrent GEMM below (pipelined, off the carried chain).
                    proj_t = jnp.dot(h[l - 1].astype(jnp.bfloat16), wih[l],
                                     preferred_element_type=jnp.float32) + bias[l]
                gates = proj_t + jnp.dot(h[l].astype(jnp.bfloat16), whh[l],
                                         preferred_element_type=jnp.float32)
                h[l], c[l] = cell(gates, c[l])
                if l == L - 1:
                    # Full-tile, sublane-aligned store, off the recurrence chain.
                    seq_scr[t * B_pad:(t + 1) * B_pad, :] = h[l]

        # fc epilogue: single (S*B_pad, H) @ (H, 128) GEMM + bias, one
        # lane-dense unmasked store (output padded to 128 lanes).
        h_all = seq_scr[...].astype(jnp.bfloat16)
        out = jnp.dot(h_all, fcw_ref[...], preferred_element_type=jnp.float32) + fcb_ref[...]
        out_ref[...] = out.astype(out_ref.dtype)

    return kernel


def lstm_fc_fused(x_tm2d, lstm_kparams, fc_w_pad, fc_b_pad, *, S, B_pad):
    """x_tm2d: (S*B_pad, D) time-major-flattened padded input -> (S*B_pad, O_pad)."""
    num_layers = len(lstm_kparams)
    H = lstm_kparams[0][1].shape[0]
    O_pad = fc_w_pad.shape[1]

    inputs = [x_tm2d]
    for (w_ih_t, w_hh_t, b) in lstm_kparams:
        inputs += [w_ih_t, w_hh_t, b]
    inputs += [fc_w_pad, fc_b_pad]

    vmem = pl.BlockSpec(memory_space=pltpu.MemorySpace.VMEM)
    return pl.pallas_call(
        make_wavefront_lstm_fc_kernel(num_layers, S, B_pad, H),
        out_shape=jax.ShapeDtypeStruct((S * B_pad, O_pad), jnp.float32),
        in_specs=[vmem] * len(inputs),
        out_specs=vmem,
        scratch_shapes=[pltpu.VMEM((S * B_pad, H), jnp.float32)],
    )(*inputs)


# ------------------------------------ Full model ------------------------------------
@functools.partial(jax.jit, static_argnames=("out_dim",))
def lstm_model_forward(x, lstm_kparams, fc_w_pad, fc_b_pad, *, out_dim):
    """x: (B, S, D) batch_first like the PyTorch module. Returns (B, S, out_dim)."""
    B, S, D = x.shape
    B_pad = ((B + 7) // 8) * 8                                    # f32 sublane tile
    x_tm = jnp.transpose(x, (1, 0, 2)).astype(jnp.float32)        # (S, B, D)
    x_tm = jnp.pad(x_tm, ((0, 0), (0, B_pad - B), (0, 0)))        # zero padded rows
    x2d = x_tm.reshape(S * B_pad, D)
    out2d = lstm_fc_fused(x2d, lstm_kparams, fc_w_pad, fc_b_pad, S=S, B_pad=B_pad)
    O_pad = out2d.shape[-1]
    out = out2d.reshape(S, B_pad, O_pad)[:, :B, :out_dim]         # drop pad rows/lanes
    return jnp.transpose(out, (1, 0, 2))


# -------------------------------- Parameter preparation --------------------------------
def to_kernel_params(lstm_params, fc_w, fc_b, *, out_pad=128):
    """PyTorch-layout params -> kernel layout.

    Per layer: (w_ih(4H,in), w_hh(4H,H), b_ih, b_hh), gate order [i,f,g,o]
      -> (w_ih^T, w_hh^T, b_ih+b_hh row), gate order [i,f,o,g], weights bf16.
    fc: transposed, zero-padded to out_pad lanes, weight bf16 / bias f32.
    """
    kparams = []
    for (w_ih, w_hh, b_ih, b_hh) in lstm_params:
        H = w_hh.shape[1]
        perm = np.concatenate([np.arange(0, 2 * H),        # i, f
                               np.arange(3 * H, 4 * H),    # o
                               np.arange(2 * H, 3 * H)])   # g
        kparams.append((
            jnp.asarray(w_ih)[perm, :].T.astype(jnp.bfloat16),
            jnp.asarray(w_hh)[perm, :].T.astype(jnp.bfloat16),
            jnp.asarray(b_ih + b_hh)[perm][None, :].astype(jnp.float32),
        ))
    O, H = fc_w.shape
    fc_w_pad = jnp.zeros((H, out_pad), jnp.bfloat16).at[:, :O].set(
        jnp.asarray(fc_w).T.astype(jnp.bfloat16))
    fc_b_pad = jnp.zeros((1, out_pad), jnp.float32).at[0, :O].set(jnp.asarray(fc_b))
    return tuple(kparams), fc_w_pad, fc_b_pad


# --------------------------------- Pure-JAX reference ---------------------------------
def lstm_model_ref(x, lstm_params, fc_w, fc_b):
    h_seq = jnp.transpose(x, (1, 0, 2)).astype(jnp.float32)       # (S, B, D)
    B = h_seq.shape[1]
    for (w_ih, w_hh, b_ih, b_hh) in lstm_params:
        H = w_hh.shape[1]
        w_ih_t, w_hh_t, b = w_ih.T, w_hh.T, b_ih + b_hh

        def step(carry, x_t, w_ih_t=w_ih_t, w_hh_t=w_hh_t, b=b, H=H):
            h, c = carry
            gates = x_t @ w_ih_t + h @ w_hh_t + b
            i = jax.nn.sigmoid(gates[:, 0 * H:1 * H])
            f = jax.nn.sigmoid(gates[:, 1 * H:2 * H])
            g = jnp.tanh(gates[:, 2 * H:3 * H])
            o = jax.nn.sigmoid(gates[:, 3 * H:4 * H])
            c = f * c + i * g
            h = o * jnp.tanh(c)
            return (h, c), h

        init = (jnp.zeros((B, H), jnp.float32), jnp.zeros((B, H), jnp.float32))
        _, h_seq = jax.lax.scan(step, init, h_seq)
    out = h_seq @ fc_w.T + fc_b                                   # (S, B, O)
    return jnp.transpose(out, (1, 0, 2))


# ------------------------------------------ Main ------------------------------------------
if __name__ == "__main__":
    # Module config (mirrors LSTM(inpust_dim, hidden_dim, layer_dim, output_dim))
    input_dim, hidden_dim, layer_dim, output_dim = 16, 32, 2, 8
    batch, seq = 2, 8

    key = jax.random.PRNGKey(0)
    k_x, key = jax.random.split(key)
    x = jax.random.normal(k_x, (batch, seq, input_dim), dtype=jnp.float32)

    # Deterministic parameter init (PyTorch-style U(-1/sqrt(H), 1/sqrt(H)))
    bound = 1.0 / np.sqrt(hidden_dim)
    lstm_params = []
    for layer in range(layer_dim):
        in_d = input_dim if layer == 0 else hidden_dim
        k1, k2, k3, k4, key = jax.random.split(key, 5)
        w_ih = jax.random.uniform(k1, (4 * hidden_dim, in_d), jnp.float32, -bound, bound)
        w_hh = jax.random.uniform(k2, (4 * hidden_dim, hidden_dim), jnp.float32, -bound, bound)
        b_ih = jax.random.uniform(k3, (4 * hidden_dim,), jnp.float32, -bound, bound)
        b_hh = jax.random.uniform(k4, (4 * hidden_dim,), jnp.float32, -bound, bound)
        lstm_params.append((w_ih, w_hh, b_ih, b_hh))
    lstm_params = tuple(lstm_params)

    k5, k6, key = jax.random.split(key, 3)
    fc_w = jax.random.uniform(k5, (output_dim, hidden_dim), jnp.float32, -bound, bound)
    fc_b = jax.random.uniform(k6, (output_dim,), jnp.float32, -bound, bound)

    lstm_kparams, fc_w_pad, fc_b_pad = to_kernel_params(lstm_params, fc_w, fc_b)

    out = lstm_model_forward(x, lstm_kparams, fc_w_pad, fc_b_pad, out_dim=output_dim)
    out = jax.block_until_ready(out)

    ref = lstm_model_ref(x, lstm_params, fc_w, fc_b)
    np.testing.assert_allclose(np.asarray(out), np.asarray(ref), rtol=2e-2, atol=2e-2)
    assert out.shape == (batch, seq, output_dim)

    print("KERNEL_OK")
</pallas_src>

<mosaic_0001>
module attributes {stable_mosaic.version = 11 : i64} {
  func.func @kernel(%arg0: memref<64x16xf32, #tpu.memory_space<vmem>>, %arg1: memref<16x128xbf16, #tpu.memory_space<vmem>>, %arg2: memref<32x128xbf16, #tpu.memory_space<vmem>>, %arg3: memref<1x128xf32, #tpu.memory_space<vmem>>, %arg4: memref<32x128xbf16, #tpu.memory_space<vmem>>, %arg5: memref<32x128xbf16, #tpu.memory_space<vmem>>, %arg6: memref<1x128xf32, #tpu.memory_space<vmem>>, %arg7: memref<32x128xbf16, #tpu.memory_space<vmem>>, %arg8: memref<1x128xf32, #tpu.memory_space<vmem>>, %arg9: memref<64x128xf32, #tpu.memory_space<vmem>>, %arg10: memref<64x32xf32, #tpu.memory_space<vmem>>) attributes {dimension_semantics = [], scalar_prefetch = 0 : i64, scratch_operands = 1 : i64, tpu.core_type = #tpu.core_type<tc>} {
    %c0 = arith.constant 0 : index
    %c0_0 = arith.constant 0 : index
    %0 = vector.load %arg1[%c0, %c0_0] : memref<16x128xbf16, #tpu.memory_space<vmem>>, vector<16x128xbf16>
    %c0_1 = arith.constant 0 : index
    %c0_2 = arith.constant 0 : index
    %1 = vector.load %arg4[%c0_1, %c0_2] : memref<32x128xbf16, #tpu.memory_space<vmem>>, vector<32x128xbf16>
    %c0_3 = arith.constant 0 : index
    %c0_4 = arith.constant 0 : index
    %2 = vector.load %arg2[%c0_3, %c0_4] : memref<32x128xbf16, #tpu.memory_space<vmem>>, vector<32x128xbf16>
    %c0_5 = arith.constant 0 : index
    %c0_6 = arith.constant 0 : index
    %3 = vector.load %arg5[%c0_5, %c0_6] : memref<32x128xbf16, #tpu.memory_space<vmem>>, vector<32x128xbf16>
    %c0_7 = arith.constant 0 : index
    %c0_8 = arith.constant 0 : index
    %4 = vector.load %arg3[%c0_7, %c0_8] : memref<1x128xf32, #tpu.memory_space<vmem>>, vector<1x128xf32>
    %c0_9 = arith.constant 0 : index
    %c0_10 = arith.constant 0 : index
    %5 = vector.load %arg6[%c0_9, %c0_10] : memref<1x128xf32, #tpu.memory_space<vmem>>, vector<1x128xf32>
    %c0_11 = arith.constant 0 : index
    %c0_12 = arith.constant 0 : index
    %6 = vector.load %arg0[%c0_11, %c0_12] : memref<64x16xf32, #tpu.memory_space<vmem>>, vector<64x16xf32>
    %7 = arith.truncf %6 : vector<64x16xf32> to vector<64x16xbf16>
    %cst = arith.constant dense<0.000000e+00> : vector<64x128xf32>
    %8 = tpu.matmul %7, %0, %cst {dimension_numbers = #tpu.dot_dimension_numbers<[1], [0], [0], [1], [0, 0, 1, 1], [], []>} : vector<64x16xbf16>, vector<16x128xbf16>, vector<64x128xf32> -> vector<64x128xf32>
    %9 = vector.broadcast %4 : vector<1x128xf32> to vector<64x128xf32>
    %10 = arith.addf %8, %9 : vector<64x128xf32>
    %cst_13 = arith.constant 0.000000e+00 : f32
    %11 = vector.broadcast %cst_13 : f32 to vector<8x32xf32>
    %cst_14 = arith.constant 0.000000e+00 : f32
    %12 = vector.broadcast %cst_14 : f32 to vector<8x32xf32>
    %cst_15 = arith.constant 0.000000e+00 : f32
    %13 = vector.broadcast %cst_15 : f32 to vector<8x32xf32>
    %cst_16 = arith.constant 0.000000e+00 : f32
    %14 = vector.broadcast %cst_16 : f32 to vector<8x32xf32>
    %15 = vector.extract_strided_slice %10 {offsets = [0, 0], sizes = [8, 128], strides = [1, 1]} : vector<64x128xf32> to vector<8x128xf32>
    %16 = arith.truncf %11 : vector<8x32xf32> to vector<8x32xbf16>
    %cst_17 = arith.constant dense<0.000000e+00> : vector<8x128xf32>
    %17 = tpu.matmul %16, %2, %cst_17 {dimension_numbers = #tpu.dot_dimension_numbers<[1], [0], [0], [1], [0, 0, 1, 1], [], []>} : vector<8x32xbf16>, vector<32x128xbf16>, vector<8x128xf32> -> vector<8x128xf32>
    %18 = arith.addf %15, %17 : vector<8x128xf32>
    %19 = vector.extract_strided_slice %18 {offsets = [0, 0], sizes = [8, 96], strides = [1, 1]} : vector<8x128xf32> to vector<8x96xf32>
    %20 = arith.negf %19 : vector<8x96xf32>
    %21 = math.exp %20 : vector<8x96xf32>
    %cst_18 = arith.constant 1.000000e+00 : f32
    %22 = vector.broadcast %cst_18 : f32 to vector<8x96xf32>
    %23 = arith.addf %22, %21 : vector<8x96xf32>
    %24 = arith.divf %22, %23 : vector<8x96xf32>
    %25 = vector.extract_strided_slice %18 {offsets = [0, 96], sizes = [8, 32], strides = [1, 1]} : vector<8x128xf32> to vector<8x32xf32>
    %26 = math.tanh %25 : vector<8x32xf32>
    %27 = vector.extract_strided_slice %24 {offsets = [0, 0], sizes = [8, 32], strides = [1, 1]} : vector<8x96xf32> to vector<8x32xf32>
    %28 = vector.extract_strided_slice %24 {offsets = [0, 32], sizes = [8, 32], strides = [1, 1]} : vector<8x96xf32> to vector<8x32xf32>
    %29 = vector.extract_strided_slice %24 {offsets = [0, 64], sizes = [8, 32], strides = [1, 1]} : vector<8x96xf32> to vector<8x32xf32>
    %30 = arith.mulf %28, %13 : vector<8x32xf32>
    %31 = arith.mulf %27, %26 : vector<8x32xf32>
    %32 = arith.addf %30, %31 : vector<8x32xf32>
    %33 = math.tanh %32 : vector<8x32xf32>
    %34 = arith.mulf %29, %33 : vector<8x32xf32>
    %35 = arith.truncf %34 : vector<8x32xf32> to vector<8x32xbf16>
    %cst_19 = arith.constant dense<0.000000e+00> : vector<8x128xf32>
    %36 = tpu.matmul %35, %1, %cst_19 {dimension_numbers = #tpu.dot_dimension_numbers<[1], [0], [0], [1], [0, 0, 1, 1], [], []>} : vector<8x32xbf16>, vector<32x128xbf16>, vector<8x128xf32> -> vector<8x128xf32>
    %37 = vector.broadcast %5 : vector<1x128xf32> to vector<8x128xf32>
    %38 = arith.addf %36, %37 : vector<8x128xf32>
    %39 = arith.truncf %12 : vector<8x32xf32> to vector<8x32xbf16>
    %cst_20 = arith.constant dense<0.000000e+00> : vector<8x128xf32>
    %40 = tpu.matmul %39, %3, %cst_20 {dimension_numbers = #tpu.dot_dimension_numbers<[1], [0], [0], [1], [0, 0, 1, 1], [], []>} : vector<8x32xbf16>, vector<32x128xbf16>, vector<8x128xf32> -> vector<8x128xf32>
    %41 = arith.addf %38, %40 : vector<8x128xf32>
    %42 = vector.extract_strided_slice %41 {offsets = [0, 0], sizes = [8, 96], strides = [1, 1]} : vector<8x128xf32> to vector<8x96xf32>
    %43 = arith.negf %42 : vector<8x96xf32>
    %44 = math.exp %43 : vector<8x96xf32>
    %cst_21 = arith.constant 1.000000e+00 : f32
    %45 = vector.broadcast %cst_21 : f32 to vector<8x96xf32>
    %46 = arith.addf %45, %44 : vector<8x96xf32>
    %47 = arith.divf %45, %46 : vector<8x96xf32>
    %48 = vector.extract_strided_slice %41 {offsets = [0, 96], sizes = [8, 32], strides = [1, 1]} : vector<8x128xf32> to vector<8x32xf32>
    %49 = math.tanh %48 : vector<8x32xf32>
    %50 = vector.extract_strided_slice %47 {offsets = [0, 0], sizes = [8, 32], strides = [1, 1]} : vector<8x96xf32> to vector<8x32xf32>
    %51 = vector.extract_strided_slice %47 {offsets = [0, 32], sizes = [8, 32], strides = [1, 1]} : vector<8x96xf32> to vector<8x32xf32>
    %52 = vector.extract_strided_slice %47 {offsets = [0, 64], sizes = [8, 32], strides = [1, 1]} : vector<8x96xf32> to vector<8x32xf32>
    %53 = arith.mulf %51, %14 : vector<8x32xf32>
    %54 = arith.mulf %50, %49 : vector<8x32xf32>
    %55 = arith.addf %53, %54 : vector<8x32xf32>
    %56 = math.tanh %55 : vector<8x32xf32>
    %57 = arith.mulf %52, %56 : vector<8x32xf32>
    %c0_22 = arith.constant 0 : index
    %c0_23 = arith.constant 0 : index
    %58 = vector.load %arg10[%c0_22, %c0_23] : memref<64x32xf32, #tpu.memory_space<vmem>>, vector<8x32xf32>
    tpu.vector_store %arg10[%c0_22, %c0_23], %57 {strides = array<i32>} : memref<64x32xf32, #tpu.memory_space<vmem>>, vector<8x32xf32>,
    %59 = vector.extract_strided_slice %10 {offsets = [8, 0], sizes = [8, 128], strides = [1, 1]} : vector<64x128xf32> to vector<8x128xf32>
    %60 = arith.truncf %34 : vector<8x32xf32> to vector<8x32xbf16>
    %cst_24 = arith.constant dense<0.000000e+00> : vector<8x128xf32>
    %61 = tpu.matmul %60, %2, %cst_24 {dimension_numbers = #tpu.dot_dimension_numbers<[1], [0], [0], [1], [0, 0, 1, 1], [], []>} : vector<8x32xbf16>, vector<32x128xbf16>, vector<8x128xf32> -> vector<8x128xf32>
    %62 = arith.addf %59, %61 : vector<8x128xf32>
    %63 = vector.extract_strided_slice %62 {offsets = [0, 0], sizes = [8, 96], strides = [1, 1]} : vector<8x128xf32> to vector<8x96xf32>
    %64 = arith.negf %63 : vector<8x96xf32>
    %65 = math.exp %64 : vector<8x96xf32>
    %cst_25 = arith.constant 1.000000e+00 : f32
    %66 = vector.broadcast %cst_25 : f32 to vector<8x96xf32>
    %67 = arith.addf %66, %65 : vector<8x96xf32>
    %68 = arith.divf %66, %67 : vector<8x96xf32>
    %69 = vector.extract_strided_slice %62 {offsets = [0, 96], sizes = [8, 32], strides = [1, 1]} : vector<8x128xf32> to vector<8x32xf32>
    %70 = math.tanh %69 : vector<8x32xf32>
    %71 = vector.extract_strided_slice %68 {offsets = [0, 0], sizes = [8, 32], strides = [1, 1]} : vector<8x96xf32> to vector<8x32xf32>
    %72 = vector.extract_strided_slice %68 {offsets = [0, 32], sizes = [8, 32], strides = [1, 1]} : vector<8x96xf32> to vector<8x32xf32>
    %73 = vector.extract_strided_slice %68 {offsets = [0, 64], sizes = [8, 32], strides = [1, 1]} : vector<8x96xf32> to vector<8x32xf32>
    %74 = arith.mulf %72, %32 : vector<8x32xf32>
    %75 = arith.mulf %71, %70 : vector<8x32xf32>
    %76 = arith.addf %74, %75 : vector<8x32xf32>
    %77 = math.tanh %76 : vector<8x32xf32>
    %78 = arith.mulf %73, %77 : vector<8x32xf32>
    %79 = arith.truncf %78 : vector<8x32xf32> to vector<8x32xbf16>
    %cst_26 = arith.constant dense<0.000000e+00> : vector<8x128xf32>
    %80 = tpu.matmul %79, %1, %cst_26 {dimension_numbers = #tpu.dot_dimension_numbers<[1], [0], [0], [1], [0, 0, 1, 1], [], []>} : vector<8x32xbf16>, vector<32x128xbf16>, vector<8x128xf32> -> vector<8x128xf32>
    %81 = vector.broadcast %5 : vector<1x128xf32> to vector<8x128xf32>
    %82 = arith.addf %80, %81 : vector<8x128xf32>
    %83 = arith.truncf %57 : vector<8x32xf32> to vector<8x32xbf16>
    %cst_27 = arith.constant dense<0.000000e+00> : vector<8x128xf32>
    %84 = tpu.matmul %83, %3, %cst_27 {dimension_numbers = #tpu.dot_dimension_numbers<[1], [0], [0], [1], [0, 0, 1, 1], [], []>} : vector<8x32xbf16>, vector<32x128xbf16>, vector<8x128xf32> -> vector<8x128xf32>
    %85 = arith.addf %82, %84 : vector<8x128xf32>
    %86 = vector.extract_strided_slice %85 {offsets = [0, 0], sizes = [8, 96], strides = [1, 1]} : vector<8x128xf32> to vector<8x96xf32>
    %87 = arith.negf %86 : vector<8x96xf32>
    %88 = math.exp %87 : vector<8x96xf32>
    %cst_28 = arith.constant 1.000000e+00 : f32
    %89 = vector.broadcast %cst_28 : f32 to vector<8x96xf32>
    %90 = arith.addf %89, %88 : vector<8x96xf32>
    %91 = arith.divf %89, %90 : vector<8x96xf32>
    %92 = vector.extract_strided_slice %85 {offsets = [0, 96], sizes = [8, 32], strides = [1, 1]} : vector<8x128xf32> to vector<8x32xf32>
    %93 = math.tanh %92 : vector<8x32xf32>
    %94 = vector.extract_strided_slice %91 {offsets = [0, 0], sizes = [8, 32], strides = [1, 1]} : vector<8x96xf32> to vector<8x32xf32>
    %95 = vector.extract_strided_slice %91 {offsets = [0, 32], sizes = [8, 32], strides = [1, 1]} : vector<8x96xf32> to vector<8x32xf32>
    %96 = vector.extract_strided_slice %91 {offsets = [0, 64], sizes = [8, 32], strides = [1, 1]} : vector<8x96xf32> to vector<8x32xf32>
    %97 = arith.mulf %95, %55 : vector<8x32xf32>
    %98 = arith.mulf %94, %93 : vector<8x32xf32>
    %99 = arith.addf %97, %98 : vector<8x32xf32>
    %100 = math.tanh %99 : vector<8x32xf32>
    %101 = arith.mulf %96, %100 : vector<8x32xf32>
    %c8 = arith.constant 8 : index
    %c0_29 = arith.constant 0 : index
    %102 = vector.load %arg10[%c8, %c0_29] : memref<64x32xf32, #tpu.memory_space<vmem>>, vector<8x32xf32>
    tpu.vector_store %arg10[%c8, %c0_29], %101 {strides = array<i32>} : memref<64x32xf32, #tpu.memory_space<vmem>>, vector<8x32xf32>,
    %103 = vector.extract_strided_slice %10 {offsets = [16, 0], sizes = [8, 128], strides = [1, 1]} : vector<64x128xf32> to vector<8x128xf32>
    %104 = arith.truncf %78 : vector<8x32xf32> to vector<8x32xbf16>
    %cst_30 = arith.constant dense<0.000000e+00> : vector<8x128xf32>
    %105 = tpu.matmul %104, %2, %cst_30 {dimension_numbers = #tpu.dot_dimension_numbers<[1], [0], [0], [1], [0, 0, 1, 1], [], []>} : vector<8x32xbf16>, vector<32x128xbf16>, vector<8x128xf32> -> vector<8x128xf32>
    %106 = arith.addf %103, %105 : vector<8x128xf32>
    %107 = vector.extract_strided_slice %106 {offsets = [0, 0], sizes = [8, 96], strides = [1, 1]} : vector<8x128xf32> to vector<8x96xf32>
    %108 = arith.negf %107 : vector<8x96xf32>
    %109 = math.exp %108 : vector<8x96xf32>
    %cst_31 = arith.constant 1.000000e+00 : f32
    %110 = vector.broadcast %cst_31 : f32 to vector<8x96xf32>
    %111 = arith.addf %110, %109 : vector<8x96xf32>
    %112 = arith.divf %110, %111 : vector<8x96xf32>
    %113 = vector.extract_strided_slice %106 {offsets = [0, 96], sizes = [8, 32], strides = [1, 1]} : vector<8x128xf32> to vector<8x32xf32>
    %114 = math.tanh %113 : vector<8x32xf32>
    %115 = vector.extract_strided_slice %112 {offsets = [0, 0], sizes = [8, 32], strides = [1, 1]} : vector<8x96xf32> to vector<8x32xf32>
    %116 = vector.extract_strided_slice %112 {offsets = [0, 32], sizes = [8, 32], strides = [1, 1]} : vector<8x96xf32> to vector<8x32xf32>
    %117 = vector.extract_strided_slice %112 {offsets = [0, 64], sizes = [8, 32], strides = [1, 1]} : vector<8x96xf32> to vector<8x32xf32>
    %118 = arith.mulf %116, %76 : vector<8x32xf32>
    %119 = arith.mulf %115, %114 : vector<8x32xf32>
    %120 = arith.addf %118, %119 : vector<8x32xf32>
    %121 = math.tanh %120 : vector<8x32xf32>
    %122 = arith.mulf %117, %121 : vector<8x32xf32>
    %123 = arith.truncf %122 : vector<8x32xf32> to vector<8x32xbf16>
    %cst_32 = arith.constant dense<0.000000e+00> : vector<8x128xf32>
    %124 = tpu.matmul %123, %1, %cst_32 {dimension_numbers = #tpu.dot_dimension_numbers<[1], [0], [0], [1], [0, 0, 1, 1], [], []>} : vector<8x32xbf16>, vector<32x128xbf16>, vector<8x128xf32> -> vector<8x128xf32>
    %125 = vector.broadcast %5 : vector<1x128xf32> to vector<8x128xf32>
    %126 = arith.addf %124, %125 : vector<8x128xf32>
    %127 = arith.truncf %101 : vector<8x32xf32> to vector<8x32xbf16>
    %cst_33 = arith.constant dense<0.000000e+00> : vector<8x128xf32>
    %128 = tpu.matmul %127, %3, %cst_33 {dimension_numbers = #tpu.dot_dimension_numbers<[1], [0], [0], [1], [0, 0, 1, 1], [], []>} : vector<8x32xbf16>, vector<32x128xbf16>, vector<8x128xf32> -> vector<8x128xf32>
    %129 = arith.addf %126, %128 : vector<8x128xf32>
    %130 = vector.extract_strided_slice %129 {offsets = [0, 0], sizes = [8, 96], strides = [1, 1]} : vector<8x128xf32> to vector<8x96xf32>
    %131 = arith.negf %130 : vector<8x96xf32>
    %132 = math.exp %131 : vector<8x96xf32>
    %cst_34 = arith.constant 1.000000e+00 : f32
    %133 = vector.broadcast %cst_34 : f32 to vector<8x96xf32>
    %134 = arith.addf %133, %132 : vector<8x96xf32>
    %135 = arith.divf %133, %134 : vector<8x96xf32>
    %136 = vector.extract_strided_slice %129 {offsets = [0, 96], sizes = [8, 32], strides = [1, 1]} : vector<8x128xf32> to vector<8x32xf32>
    %137 = math.tanh %136 : vector<8x32xf32>
    %138 = vector.extract_strided_slice %135 {offsets = [0, 0], sizes = [8, 32], strides = [1, 1]} : vector<8x96xf32> to vector<8x32xf32>
    %139 = vector.extract_strided_slice %135 {offsets = [0, 32], sizes = [8, 32], strides = [1, 1]} : vector<8x96xf32> to vector<8x32xf32>
    %140 = vector.extract_strided_slice %135 {offsets = [0, 64], sizes = [8, 32], strides = [1, 1]} : vector<8x96xf32> to vector<8x32xf32>
    %141 = arith.mulf %139, %99 : vector<8x32xf32>
    %142 = arith.mulf %138, %137 : vector<8x32xf32>
    %143 = arith.addf %141, %142 : vector<8x32xf32>
    %144 = math.tanh %143 : vector<8x32xf32>
    %145 = arith.mulf %140, %144 : vector<8x32xf32>
    %c16 = arith.constant 16 : index
    %c0_35 = arith.constant 0 : index
    %146 = vector.load %arg10[%c16, %c0_35] : memref<64x32xf32, #tpu.memory_space<vmem>>, vector<8x32xf32>
    tpu.vector_store %arg10[%c16, %c0_35], %145 {strides = array<i32>} : memref<64x32xf32, #tpu.memory_space<vmem>>, vector<8x32xf32>,
    %147 = vector.extract_strided_slice %10 {offsets = [24, 0], sizes = [8, 128], strides = [1, 1]} : vector<64x128xf32> to vector<8x128xf32>
    %148 = arith.truncf %122 : vector<8x32xf32> to vector<8x32xbf16>
    %cst_36 = arith.constant dense<0.000000e+00> : vector<8x128xf32>
    %149 = tpu.matmul %148, %2, %cst_36 {dimension_numbers = #tpu.dot_dimension_numbers<[1], [0], [0], [1], [0, 0, 1, 1], [], []>} : vector<8x32xbf16>, vector<32x128xbf16>, vector<8x128xf32> -> vector<8x128xf32>
    %150 = arith.addf %147, %149 : vector<8x128xf32>
    %151 = vector.extract_strided_slice %150 {offsets = [0, 0], sizes = [8, 96], strides = [1, 1]} : vector<8x128xf32> to vector<8x96xf32>
    %152 = arith.negf %151 : vector<8x96xf32>
    %153 = math.exp %152 : vector<8x96xf32>
    %cst_37 = arith.constant 1.000000e+00 : f32
    %154 = vector.broadcast %cst_37 : f32 to vector<8x96xf32>
    %155 = arith.addf %154, %153 : vector<8x96xf32>
    %156 = arith.divf %154, %155 : vector<8x96xf32>
    %157 = vector.extract_strided_slice %150 {offsets = [0, 96], sizes = [8, 32], strides = [1, 1]} : vector<8x128xf32> to vector<8x32xf32>
    %158 = math.tanh %157 : vector<8x32xf32>
    %159 = vector.extract_strided_slice %156 {offsets = [0, 0], sizes = [8, 32], strides = [1, 1]} : vector<8x96xf32> to vector<8x32xf32>
    %160 = vector.extract_strided_slice %156 {offsets = [0, 32], sizes = [8, 32], strides = [1, 1]} : vector<8x96xf32> to vector<8x32xf32>
    %161 = vector.extract_strided_slice %156 {offsets = [0, 64], sizes = [8, 32], strides = [1, 1]} : vector<8x96xf32> to vector<8x32xf32>
    %162 = arith.mulf %160, %120 : vector<8x32xf32>
    %163 = arith.mulf %159, %158 : vector<8x32xf32>
    %164 = arith.addf %162, %163 : vector<8x32xf32>
    %165 = math.tanh %164 : vector<8x32xf32>
    %166 = arith.mulf %161, %165 : vector<8x32xf32>
    %167 = arith.truncf %166 : vector<8x32xf32> to vector<8x32xbf16>
    %cst_38 = arith.constant dense<0.000000e+00> : vector<8x128xf32>
    %168 = tpu.matmul %167, %1, %cst_38 {dimension_numbers = #tpu.dot_dimension_numbers<[1], [0], [0], [1], [0, 0, 1, 1], [], []>} : vector<8x32xbf16>, vector<32x128xbf16>, vector<8x128xf32> -> vector<8x128xf32>
    %169 = vector.broadcast %5 : vector<1x128xf32> to vector<8x128xf32>
    %170 = arith.addf %168, %169 : vector<8x128xf32>
    %171 = arith.truncf %145 : vector<8x32xf32> to vector<8x32xbf16>
    %cst_39 = arith.constant dense<0.000000e+00> : vector<8x128xf32>
    %172 = tpu.matmul %171, %3, %cst_39 {dimension_numbers = #tpu.dot_dimension_numbers<[1], [0], [0], [1], [0, 0, 1, 1], [], []>} : vector<8x32xbf16>, vector<32x128xbf16>, vector<8x128xf32> -> vector<8x128xf32>
    %173 = arith.addf %170, %172 : vector<8x128xf32>
    %174 = vector.extract_strided_slice %173 {offsets = [0, 0], sizes = [8, 96], strides = [1, 1]} : vector<8x128xf32> to vector<8x96xf32>
    %175 = arith.negf %174 : vector<8x96xf32>
    %176 = math.exp %175 : vector<8x96xf32>
    %cst_40 = arith.constant 1.000000e+00 : f32
    %177 = vector.broadcast %cst_40 : f32 to vector<8x96xf32>
    %178 = arith.addf %177, %176 : vector<8x96xf32>
    %179 = arith.divf %177, %178 : vector<8x96xf32>
    %180 = vector.extract_strided_slice %173 {offsets = [0, 96], sizes = [8, 32], strides = [1, 1]} : vector<8x128xf32> to vector<8x32xf32>
    %181 = math.tanh %180 : vector<8x32xf32>
    %182 = vector.extract_strided_slice %179 {offsets = [0, 0], sizes = [8, 32], strides = [1, 1]} : vector<8x96xf32> to vector<8x32xf32>
    %183 = vector.extract_strided_slice %179 {offsets = [0, 32], sizes = [8, 32], strides = [1, 1]} : vector<8x96xf32> to vector<8x32xf32>
    %184 = vector.extract_strided_slice %179 {offsets = [0, 64], sizes = [8, 32], strides = [1, 1]} : vector<8x96xf32> to vector<8x32xf32>
    %185 = arith.mulf %183, %143 : vector<8x32xf32>
    %186 = arith.mulf %182, %181 : vector<8x32xf32>
    %187 = arith.addf %185, %186 : vector<8x32xf32>
    %188 = math.tanh %187 : vector<8x32xf32>
    %189 = arith.mulf %184, %188 : vector<8x32xf32>
    %c24 = arith.constant 24 : index
    %c0_41 = arith.constant 0 : index
    %190 = vector.load %arg10[%c24, %c0_41] : memref<64x32xf32, #tpu.memory_space<vmem>>, vector<8x32xf32>
    tpu.vector_store %arg10[%c24, %c0_41], %189 {strides = array<i32>} : memref<64x32xf32, #tpu.memory_space<vmem>>, vector<8x32xf32>,
    %191 = vector.extract_strided_slice %10 {offsets = [32, 0], sizes = [8, 128], strides = [1, 1]} : vector<64x128xf32> to vector<8x128xf32>
    %192 = arith.truncf %166 : vector<8x32xf32> to vector<8x32xbf16>
    %cst_42 = arith.constant dense<0.000000e+00> : vector<8x128xf32>
    %193 = tpu.matmul %192, %2, %cst_42 {dimension_numbers = #tpu.dot_dimension_numbers<[1], [0], [0], [1], [0, 0, 1, 1], [], []>} : vector<8x32xbf16>, vector<32x128xbf16>, vector<8x128xf32> -> vector<8x128xf32>
    %194 = arith.addf %191, %193 : vector<8x128xf32>
    %195 = vector.extract_strided_slice %194 {offsets = [0, 0], sizes = [8, 96], strides = [1, 1]} : vector<8x128xf32> to vector<8x96xf32>
    %196 = arith.negf %195 : vector<8x96xf32>
    %197 = math.exp %196 : vector<8x96xf32>
    %cst_43 = arith.constant 1.000000e+00 : f32
    %198 = vector.broadcast %cst_43 : f32 to vector<8x96xf32>
    %199 = arith.addf %198, %197 : vector<8x96xf32>
    %200 = arith.divf %198, %199 : vector<8x96xf32>
    %201 = vector.extract_strided_slice %194 {offsets = [0, 96], sizes = [8, 32], strides = [1, 1]} : vector<8x128xf32> to vector<8x32xf32>
    %202 = math.tanh %201 : vector<8x32xf32>
    %203 = vector.extract_strided_slice %200 {offsets = [0, 0], sizes = [8, 32], strides = [1, 1]} : vector<8x96xf32> to vector<8x32xf32>
    %204 = vector.extract_strided_slice %200 {offsets = [0, 32], sizes = [8, 32], strides = [1, 1]} : vector<8x96xf32> to vector<8x32xf32>
    %205 = vector.extract_strided_slice %200 {offsets = [0, 64], sizes = [8, 32], strides = [1, 1]} : vector<8x96xf32> to vector<8x32xf32>
    %206 = arith.mulf %204, %164 : vector<8x32xf32>
    %207 = arith.mulf %203, %202 : vector<8x32xf32>
    %208 = arith.addf %206, %207 : vector<8x32xf32>
    %209 = math.tanh %208 : vector<8x32xf32>
    %210 = arith.mulf %205, %209 : vector<8x32xf32>
    %211 = arith.truncf %210 : vector<8x32xf32> to vector<8x32xbf16>
    %cst_44 = arith.constant dense<0.000000e+00> : vector<8x128xf32>
    %212 = tpu.matmul %211, %1, %cst_44 {dimension_numbers = #tpu.dot_dimension_numbers<[1], [0], [0], [1], [0, 0, 1, 1], [], []>} : vector<8x32xbf16>, vector<32x128xbf16>, vector<8x128xf32> -> vector<8x128xf32>
    %213 = vector.broadcast %5 : vector<1x128xf32> to vector<8x128xf32>
    %214 = arith.addf %212, %213 : vector<8x128xf32>
    %215 = arith.truncf %189 : vector<8x32xf32> to vector<8x32xbf16>
    %cst_45 = arith.constant dense<0.000000e+00> : vector<8x128xf32>
    %216 = tpu.matmul %215, %3, %cst_45 {dimension_numbers = #tpu.dot_dimension_numbers<[1], [0], [0], [1], [0, 0, 1, 1], [], []>} : vector<8x32xbf16>, vector<32x128xbf16>, vector<8x128xf32> -> vector<8x128xf32>
    %217 = arith.addf %214, %216 : vector<8x128xf32>
    %218 = vector.extract_strided_slice %217 {offsets = [0, 0], sizes = [8, 96], strides = [1, 1]} : vector<8x128xf32> to vector<8x96xf32>
    %219 = arith.negf %218 : vector<8x96xf32>
    %220 = math.exp %219 : vector<8x96xf32>
    %cst_46 = arith.constant 1.000000e+00 : f32
    %221 = vector.broadcast %cst_46 : f32 to vector<8x96xf32>
    %222 = arith.addf %221, %220 : vector<8x96xf32>
    %223 = arith.divf %221, %222 : vector<8x96xf32>
    %224 = vector.extract_strided_slice %217 {offsets = [0, 96], sizes = [8, 32], strides = [1, 1]} : vector<8x128xf32> to vector<8x32xf32>
    %225 = math.tanh %224 : vector<8x32xf32>
    %226 = vector.extract_strided_slice %223 {offsets = [0, 0], sizes = [8, 32], strides = [1, 1]} : vector<8x96xf32> to vector<8x32xf32>
    %227 = vector.extract_strided_slice %223 {offsets = [0, 32], sizes = [8, 32], strides = [1, 1]} : vector<8x96xf32> to vector<8x32xf32>
    %228 = vector.extract_strided_slice %223 {offsets = [0, 64], sizes = [8, 32], strides = [1, 1]} : vector<8x96xf32> to vector<8x32xf32>
    %229 = arith.mulf %227, %187 : vector<8x32xf32>
    %230 = arith.mulf %226, %225 : vector<8x32xf32>
    %231 = arith.addf %229, %230 : vector<8x32xf32>
    %232 = math.tanh %231 : vector<8x32xf32>
    %233 = arith.mulf %228, %232 : vector<8x32xf32>
    %c32 = arith.constant 32 : index
    %c0_47 = arith.constant 0 : index
    %234 = vector.load %arg10[%c32, %c0_47] : memref<64x32xf32, #tpu.memory_space<vmem>>, vector<8x32xf32>
    tpu.vector_store %arg10[%c32, %c0_47], %233 {strides = array<i32>} : memref<64x32xf32, #tpu.memory_space<vmem>>, vector<8x32xf32>,
    %235 = vector.extract_strided_slice %10 {offsets = [40, 0], sizes = [8, 128], strides = [1, 1]} : vector<64x128xf32> to vector<8x128xf32>
    %236 = arith.truncf %210 : vector<8x32xf32> to vector<8x32xbf16>
    %cst_48 = arith.constant dense<0.000000e+00> : vector<8x128xf32>
    %237 = tpu.matmul %236, %2, %cst_48 {dimension_numbers = #tpu.dot_dimension_numbers<[1], [0], [0], [1], [0, 0, 1, 1], [], []>} : vector<8x32xbf16>, vector<32x128xbf16>, vector<8x128xf32> -> vector<8x128xf32>
    %238 = arith.addf %235, %237 : vector<8x128xf32>
    %239 = vector.extract_strided_slice %238 {offsets = [0, 0], sizes = [8, 96], strides = [1, 1]} : vector<8x128xf32> to vector<8x96xf32>
    %240 = arith.negf %239 : vector<8x96xf32>
    %241 = math.exp %240 : vector<8x96xf32>
    %cst_49 = arith.constant 1.000000e+00 : f32
    %242 = vector.broadcast %cst_49 : f32 to vector<8x96xf32>
    %243 = arith.addf %242, %241 : vector<8x96xf32>
    %244 = arith.divf %242, %243 : vector<8x96xf32>
    %245 = vector.extract_strided_slice %238 {offsets = [0, 96], sizes = [8, 32], strides = [1, 1]} : vector<8x128xf32> to vector<8x32xf32>
    %246 = math.tanh %245 : vector<8x32xf32>
    %247 = vector.extract_strided_slice %244 {offsets = [0, 0], sizes = [8, 32], strides = [1, 1]} : vector<8x96xf32> to vector<8x32xf32>
    %248 = vector.extract_strided_slice %244 {offsets = [0, 32], sizes = [8, 32], strides = [1, 1]} : vector<8x96xf32> to vector<8x32xf32>
    %249 = vector.extract_strided_slice %244 {offsets = [0, 64], sizes = [8, 32], strides = [1, 1]} : vector<8x96xf32> to vector<8x32xf32>
    %250 = arith.mulf %248, %208 : vector<8x32xf32>
    %251 = arith.mulf %247, %246 : vector<8x32xf32>
    %252 = arith.addf %250, %251 : vector<8x32xf32>
    %253 = math.tanh %252 : vector<8x32xf32>
    %254 = arith.mulf %249, %253 : vector<8x32xf32>
    %255 = arith.truncf %254 : vector<8x32xf32> to vector<8x32xbf16>
    %cst_50 = arith.constant dense<0.000000e+00> : vector<8x128xf32>
    %256 = tpu.matmul %255, %1, %cst_50 {dimension_numbers = #tpu.dot_dimension_numbers<[1], [0], [0], [1], [0, 0, 1, 1], [], []>} : vector<8x32xbf16>, vector<32x128xbf16>, vector<8x128xf32> -> vector<8x128xf32>
    %257 = vector.broadcast %5 : vector<1x128xf32> to vector<8x128xf32>
    %258 = arith.addf %256, %257 : vector<8x128xf32>
    %259 = arith.truncf %233 : vector<8x32xf32> to vector<8x32xbf16>
    %cst_51 = arith.constant dense<0.000000e+00> : vector<8x128xf32>
    %260 = tpu.matmul %259, %3, %cst_51 {dimension_numbers = #tpu.dot_dimension_numbers<[1], [0], [0], [1], [0, 0, 1, 1], [], []>} : vector<8x32xbf16>, vector<32x128xbf16>, vector<8x128xf32> -> vector<8x128xf32>
    %261 = arith.addf %258, %260 : vector<8x128xf32>
    %262 = vector.extract_strided_slice %261 {offsets = [0, 0], sizes = [8, 96], strides = [1, 1]} : vector<8x128xf32> to vector<8x96xf32>
    %263 = arith.negf %262 : vector<8x96xf32>
    %264 = math.exp %263 : vector<8x96xf32>
    %cst_52 = arith.constant 1.000000e+00 : f32
    %265 = vector.broadcast %cst_52 : f32 to vector<8x96xf32>
    %266 = arith.addf %265, %264 : vector<8x96xf32>
    %267 = arith.divf %265, %266 : vector<8x96xf32>
    %268 = vector.extract_strided_slice %261 {offsets = [0, 96], sizes = [8, 32], strides = [1, 1]} : vector<8x128xf32> to vector<8x32xf32>
    %269 = math.tanh %268 : vector<8x32xf32>
    %270 = vector.extract_strided_slice %267 {offsets = [0, 0], sizes = [8, 32], strides = [1, 1]} : vector<8x96xf32> to vector<8x32xf32>
    %271 = vector.extract_strided_slice %267 {offsets = [0, 32], sizes = [8, 32], strides = [1, 1]} : vector<8x96xf32> to vector<8x32xf32>
    %272 = vector.extract_strided_slice %267 {offsets = [0, 64], sizes = [8, 32], strides = [1, 1]} : vector<8x96xf32> to vector<8x32xf32>
    %273 = arith.mulf %271, %231 : vector<8x32xf32>
    %274 = arith.mulf %270, %269 : vector<8x32xf32>
    %275 = arith.addf %273, %274 : vector<8x32xf32>
    %276 = math.tanh %275 : vector<8x32xf32>
    %277 = arith.mulf %272, %276 : vector<8x32xf32>
    %c40 = arith.constant 40 : index
    %c0_53 = arith.constant 0 : index
    %278 = vector.load %arg10[%c40, %c0_53] : memref<64x32xf32, #tpu.memory_space<vmem>>, vector<8x32xf32>
    tpu.vector_store %arg10[%c40, %c0_53], %277 {strides = array<i32>} : memref<64x32xf32, #tpu.memory_space<vmem>>, vector<8x32xf32>,
    %279 = vector.extract_strided_slice %10 {offsets = [48, 0], sizes = [8, 128], strides = [1, 1]} : vector<64x128xf32> to vector<8x128xf32>
    %280 = arith.truncf %254 : vector<8x32xf32> to vector<8x32xbf16>
    %cst_54 = arith.constant dense<0.000000e+00> : vector<8x128xf32>
    %281 = tpu.matmul %280, %2, %cst_54 {dimension_numbers = #tpu.dot_dimension_numbers<[1], [0], [0], [1], [0, 0, 1, 1], [], []>} : vector<8x32xbf16>, vector<32x128xbf16>, vector<8x128xf32> -> vector<8x128xf32>
    %282 = arith.addf %279, %281 : vector<8x128xf32>
    %283 = vector.extract_strided_slice %282 {offsets = [0, 0], sizes = [8, 96], strides = [1, 1]} : vector<8x128xf32> to vector<8x96xf32>
    %284 = arith.negf %283 : vector<8x96xf32>
    %285 = math.exp %284 : vector<8x96xf32>
    %cst_55 = arith.constant 1.000000e+00 : f32
    %286 = vector.broadcast %cst_55 : f32 to vector<8x96xf32>
    %287 = arith.addf %286, %285 : vector<8x96xf32>
    %288 = arith.divf %286, %287 : vector<8x96xf32>
    %289 = vector.extract_strided_slice %282 {offsets = [0, 96], sizes = [8, 32], strides = [1, 1]} : vector<8x128xf32> to vector<8x32xf32>
    %290 = math.tanh %289 : vector<8x32xf32>
    %291 = vector.extract_strided_slice %288 {offsets = [0, 0], sizes = [8, 32], strides = [1, 1]} : vector<8x96xf32> to vector<8x32xf32>
    %292 = vector.extract_strided_slice %288 {offsets = [0, 32], sizes = [8, 32], strides = [1, 1]} : vector<8x96xf32> to vector<8x32xf32>
    %293 = vector.extract_strided_slice %288 {offsets = [0, 64], sizes = [8, 32], strides = [1, 1]} : vector<8x96xf32> to vector<8x32xf32>
    %294 = arith.mulf %292, %252 : vector<8x32xf32>
    %295 = arith.mulf %291, %290 : vector<8x32xf32>
    %296 = arith.addf %294, %295 : vector<8x32xf32>
    %297 = math.tanh %296 : vector<8x32xf32>
    %298 = arith.mulf %293, %297 : vector<8x32xf32>
    %299 = arith.truncf %298 : vector<8x32xf32> to vector<8x32xbf16>
    %cst_56 = arith.constant dense<0.000000e+00> : vector<8x128xf32>
    %300 = tpu.matmul %299, %1, %cst_56 {dimension_numbers = #tpu.dot_dimension_numbers<[1], [0], [0], [1], [0, 0, 1, 1], [], []>} : vector<8x32xbf16>, vector<32x128xbf16>, vector<8x128xf32> -> vector<8x128xf32>
    %301 = vector.broadcast %5 : vector<1x128xf32> to vector<8x128xf32>
    %302 = arith.addf %300, %301 : vector<8x128xf32>
    %303 = arith.truncf %277 : vector<8x32xf32> to vector<8x32xbf16>
    %cst_57 = arith.constant dense<0.000000e+00> : vector<8x128xf32>
    %304 = tpu.matmul %303, %3, %cst_57 {dimension_numbers = #tpu.dot_dimension_numbers<[1], [0], [0], [1], [0, 0, 1, 1], [], []>} : vector<8x32xbf16>, vector<32x128xbf16>, vector<8x128xf32> -> vector<8x128xf32>
    %305 = arith.addf %302, %304 : vector<8x128xf32>
    %306 = vector.extract_strided_slice %305 {offsets = [0, 0], sizes = [8, 96], strides = [1, 1]} : vector<8x128xf32> to vector<8x96xf32>
    %307 = arith.negf %306 : vector<8x96xf32>
    %308 = math.exp %307 : vector<8x96xf32>
    %cst_58 = arith.constant 1.000000e+00 : f32
    %309 = vector.broadcast %cst_58 : f32 to vector<8x96xf32>
    %310 = arith.addf %309, %308 : vector<8x96xf32>
    %311 = arith.divf %309, %310 : vector<8x96xf32>
    %312 = vector.extract_strided_slice %305 {offsets = [0, 96], sizes = [8, 32], strides = [1, 1]} : vector<8x128xf32> to vector<8x32xf32>
    %313 = math.tanh %312 : vector<8x32xf32>
    %314 = vector.extract_strided_slice %311 {offsets = [0, 0], sizes = [8, 32], strides = [1, 1]} : vector<8x96xf32> to vector<8x32xf32>
    %315 = vector.extract_strided_slice %311 {offsets = [0, 32], sizes = [8, 32], strides = [1, 1]} : vector<8x96xf32> to vector<8x32xf32>
    %316 = vector.extract_strided_slice %311 {offsets = [0, 64], sizes = [8, 32], strides = [1, 1]} : vector<8x96xf32> to vector<8x32xf32>
    %317 = arith.mulf %315, %275 : vector<8x32xf32>
    %318 = arith.mulf %314, %313 : vector<8x32xf32>
    %319 = arith.addf %317, %318 : vector<8x32xf32>
    %320 = math.tanh %319 : vector<8x32xf32>
    %321 = arith.mulf %316, %320 : vector<8x32xf32>
    %c48 = arith.constant 48 : index
    %c0_59 = arith.constant 0 : index
    %322 = vector.load %arg10[%c48, %c0_59] : memref<64x32xf32, #tpu.memory_space<vmem>>, vector<8x32xf32>
    tpu.vector_store %arg10[%c48, %c0_59], %321 {strides = array<i32>} : memref<64x32xf32, #tpu.memory_space<vmem>>, vector<8x32xf32>,
    %323 = vector.extract_strided_slice %10 {offsets = [56, 0], sizes = [8, 128], strides = [1, 1]} : vector<64x128xf32> to vector<8x128xf32>
    %324 = arith.truncf %298 : vector<8x32xf32> to vector<8x32xbf16>
    %cst_60 = arith.constant dense<0.000000e+00> : vector<8x128xf32>
    %325 = tpu.matmul %324, %2, %cst_60 {dimension_numbers = #tpu.dot_dimension_numbers<[1], [0], [0], [1], [0, 0, 1, 1], [], []>} : vector<8x32xbf16>, vector<32x128xbf16>, vector<8x128xf32> -> vector<8x128xf32>
    %326 = arith.addf %323, %325 : vector<8x128xf32>
    %327 = vector.extract_strided_slice %326 {offsets = [0, 0], sizes = [8, 96], strides = [1, 1]} : vector<8x128xf32> to vector<8x96xf32>
    %328 = arith.negf %327 : vector<8x96xf32>
    %329 = math.exp %328 : vector<8x96xf32>
    %cst_61 = arith.constant 1.000000e+00 : f32
    %330 = vector.broadcast %cst_61 : f32 to vector<8x96xf32>
    %331 = arith.addf %330, %329 : vector<8x96xf32>
    %332 = arith.divf %330, %331 : vector<8x96xf32>
    %333 = vector.extract_strided_slice %326 {offsets = [0, 96], sizes = [8, 32], strides = [1, 1]} : vector<8x128xf32> to vector<8x32xf32>
    %334 = math.tanh %333 : vector<8x32xf32>
    %335 = vector.extract_strided_slice %332 {offsets = [0, 0], sizes = [8, 32], strides = [1, 1]} : vector<8x96xf32> to vector<8x32xf32>
    %336 = vector.extract_strided_slice %332 {offsets = [0, 32], sizes = [8, 32], strides = [1, 1]} : vector<8x96xf32> to vector<8x32xf32>
    %337 = vector.extract_strided_slice %332 {offsets = [0, 64], sizes = [8, 32], strides = [1, 1]} : vector<8x96xf32> to vector<8x32xf32>
    %338 = arith.mulf %336, %296 : vector<8x32xf32>
    %339 = arith.mulf %335, %334 : vector<8x32xf32>
    %340 = arith.addf %338, %339 : vector<8x32xf32>
    %341 = math.tanh %340 : vector<8x32xf32>
    %342 = arith.mulf %337, %341 : vector<8x32xf32>
    %343 = arith.truncf %342 : vector<8x32xf32> to vector<8x32xbf16>
    %cst_62 = arith.constant dense<0.000000e+00> : vector<8x128xf32>
    %344 = tpu.matmul %343, %1, %cst_62 {dimension_numbers = #tpu.dot_dimension_numbers<[1], [0], [0], [1], [0, 0, 1, 1], [], []>} : vector<8x32xbf16>, vector<32x128xbf16>, vector<8x128xf32> -> vector<8x128xf32>
    %345 = vector.broadcast %5 : vector<1x128xf32> to vector<8x128xf32>
    %346 = arith.addf %344, %345 : vector<8x128xf32>
    %347 = arith.truncf %321 : vector<8x32xf32> to vector<8x32xbf16>
    %cst_63 = arith.constant dense<0.000000e+00> : vector<8x128xf32>
    %348 = tpu.matmul %347, %3, %cst_63 {dimension_numbers = #tpu.dot_dimension_numbers<[1], [0], [0], [1], [0, 0, 1, 1], [], []>} : vector<8x32xbf16>, vector<32x128xbf16>, vector<8x128xf32> -> vector<8x128xf32>
    %349 = arith.addf %346, %348 : vector<8x128xf32>
    %350 = vector.extract_strided_slice %349 {offsets = [0, 0], sizes = [8, 96], strides = [1, 1]} : vector<8x128xf32> to vector<8x96xf32>
    %351 = arith.negf %350 : vector<8x96xf32>
    %352 = math.exp %351 : vector<8x96xf32>
    %cst_64 = arith.constant 1.000000e+00 : f32
    %353 = vector.broadcast %cst_64 : f32 to vector<8x96xf32>
    %354 = arith.addf %353, %352 : vector<8x96xf32>
    %355 = arith.divf %353, %354 : vector<8x96xf32>
    %356 = vector.extract_strided_slice %349 {offsets = [0, 96], sizes = [8, 32], strides = [1, 1]} : vector<8x128xf32> to vector<8x32xf32>
    %357 = math.tanh %356 : vector<8x32xf32>
    %358 = vector.extract_strided_slice %355 {offsets = [0, 0], sizes = [8, 32], strides = [1, 1]} : vector<8x96xf32> to vector<8x32xf32>
    %359 = vector.extract_strided_slice %355 {offsets = [0, 32], sizes = [8, 32], strides = [1, 1]} : vector<8x96xf32> to vector<8x32xf32>
    %360 = vector.extract_strided_slice %355 {offsets = [0, 64], sizes = [8, 32], strides = [1, 1]} : vector<8x96xf32> to vector<8x32xf32>
    %361 = arith.mulf %359, %319 : vector<8x32xf32>
    %362 = arith.mulf %358, %357 : vector<8x32xf32>
    %363 = arith.addf %361, %362 : vector<8x32xf32>
    %364 = math.tanh %363 : vector<8x32xf32>
    %365 = arith.mulf %360, %364 : vector<8x32xf32>
    %c56 = arith.constant 56 : index
    %c0_65 = arith.constant 0 : index
    %366 = vector.load %arg10[%c56, %c0_65] : memref<64x32xf32, #tpu.memory_space<vmem>>, vector<8x32xf32>
    tpu.vector_store %arg10[%c56, %c0_65], %365 {strides = array<i32>} : memref<64x32xf32, #tpu.memory_space<vmem>>, vector<8x32xf32>,
    %c0_66 = arith.constant 0 : index
    %c0_67 = arith.constant 0 : index
    %367 = vector.load %arg10[%c0_66, %c0_67] : memref<64x32xf32, #tpu.memory_space<vmem>>, vector<64x32xf32>
    %368 = arith.truncf %367 : vector<64x32xf32> to vector<64x32xbf16>
    %c0_68 = arith.constant 0 : index
    %c0_69 = arith.constant 0 : index
    %369 = vector.load %arg7[%c0_68, %c0_69] : memref<32x128xbf16, #tpu.memory_space<vmem>>, vector<32x128xbf16>
    %cst_70 = arith.constant dense<0.000000e+00> : vector<64x128xf32>
    %370 = tpu.matmul %368, %369, %cst_70 {dimension_numbers = #tpu.dot_dimension_numbers<[1], [0], [0], [1], [0, 0, 1, 1], [], []>} : vector<64x32xbf16>, vector<32x128xbf16>, vector<64x128xf32> -> vector<64x128xf32>
    %c0_71 = arith.constant 0 : index
    %c0_72 = arith.constant 0 : index
    %371 = vector.load %arg8[%c0_71, %c0_72] : memref<1x128xf32, #tpu.memory_space<vmem>>, vector<1x128xf32>
    %372 = vector.broadcast %371 : vector<1x128xf32> to vector<64x128xf32>
    %373 = arith.addf %370, %372 : vector<64x128xf32>
    %c0_73 = arith.constant 0 : index
    %c0_74 = arith.constant 0 : index
    %374 = vector.load %arg9[%c0_73, %c0_74] : memref<64x128xf32, #tpu.memory_space<vmem>>, vector<64x128xf32>
    tpu.vector_store %arg9[%c0_73, %c0_74], %373 {strides = array<i32>} : memref<64x128xf32, #tpu.memory_space<vmem>>, vector<64x128xf32>,
    return
  }
}

</mosaic_0001>

<llo_original>
// kernel: lstm_model_forward.1
$region0: #{lstm_model_forward.1}
  #allocation0 [shape = 'u32[]', space=smem, size = 0x4, offset = 0x4, fixed_abs, tag = 'smem constant byte address 0x4 - core index']
  #allocation1 [shape = 'u32[144,128]{1,0:T(1,128)}', space=vmem, size = 0x12000, scoped, tag = 'internal scratch']
  #allocation2 [shape = 'f32[64,32]{1,0:T(8,128)}', space=vmem, size = 0x8000, scoped, tag = 'scratch operand']
  %s0 = inlined_call_operand.vmem [shape: f32[64,16], index: 0, kind: input, shape index: {}]
  %s1 = inlined_call_operand.vmem [shape: bf16[16,128], index: 1, kind: input, shape index: {}]
  %s2 = inlined_call_operand.vmem [shape: bf16[32,128], index: 2, kind: input, shape index: {}]
  %s3 = inlined_call_operand.vmem [shape: f32[1,128], index: 3, kind: input, shape index: {}]
  %s4 = inlined_call_operand.vmem [shape: bf16[32,128], index: 4, kind: input, shape index: {}]
  %s5 = inlined_call_operand.vmem [shape: bf16[32,128], index: 5, kind: input, shape index: {}]
  %s6 = inlined_call_operand.vmem [shape: f32[1,128], index: 6, kind: input, shape index: {}]
  %s7 = inlined_call_operand.vmem [shape: bf16[32,128], index: 7, kind: input, shape index: {}]
  %s8 = inlined_call_operand.vmem [shape: f32[1,128], index: 8, kind: input, shape index: {}]
  %s9 = inlined_call_operand.vmem [shape: f32[64,128], index: 9, kind: output, shape index: {}]
  %s10 = sld [smem:[#allocation0]]
  $region46: #{lstm_model_forward.1} parent=0
    _
  %s12 = ssub.s32 1, %s10
  %s13 = scalar_select 0, %s12, %s10
  // Predicated region
  $region2: #{lstm_model_forward.1} parent=0 // pred_check
    _
  $region3: #{lstm_model_forward.1} parent=0 // pred_check_branch
    %15 = sbr.rel (0) target = $region5
  $region4: #{lstm_model_forward.1} parent=0 // pred_region
    _
  $region5: #{lstm_model_forward.1} parent=0 // pred_fallthru
    _
  // Predicated region
  $region6: #{lstm_model_forward.1} parent=0 // pred_check
    _
  $region7: #{lstm_model_forward.1} parent=0 // pred_check_branch
    %17 = sbr.rel (0) target = $region9
  $region8: #{lstm_model_forward.1} parent=0 // pred_region
    _
  $region9: #{lstm_model_forward.1} parent=0 // pred_fallthru
    _
  // Predicated region
  $region10: #{lstm_model_forward.1} parent=0 // pred_check
    _
  $region11: #{lstm_model_forward.1} parent=0 // pred_check_branch
    %19 = sbr.rel (0) target = $region13
  $region12: #{lstm_model_forward.1} parent=0 // pred_region
    _
  $region13: #{lstm_model_forward.1} parent=0 // pred_fallthru
    _
  // Predicated region
  $region14: #{lstm_model_forward.1} parent=0 // pred_check
    _
  $region15: #{lstm_model_forward.1} parent=0 // pred_check_branch
    %21 = sbr.rel (0) target = $region17
  $region16: #{lstm_model_forward.1} parent=0 // pred_region
    _
  $region17: #{lstm_model_forward.1} parent=0 // pred_fallthru
    _
  // Predicated region
  $region18: #{lstm_model_forward.1} parent=0 // pred_check
    _
  $region19: #{lstm_model_forward.1} parent=0 // pred_check_branch
    %23 = sbr.rel (0) target = $region21
  $region20: #{lstm_model_forward.1} parent=0 // pred_region
    _
  $region21: #{lstm_model_forward.1} parent=0 // pred_fallthru
    _
  // Predicated region
  $region22: #{lstm_model_forward.1} parent=0 // pred_check
    _
  $region23: #{lstm_model_forward.1} parent=0 // pred_check_branch
    %25 = sbr.rel (0) target = $region25
  $region24: #{lstm_model_forward.1} parent=0 // pred_region
    _
  $region25: #{lstm_model_forward.1} parent=0 // pred_fallthru
    _
  // Predicated region
  $region26: #{lstm_model_forward.1} parent=0 // pred_check
    _
  $region27: #{lstm_model_forward.1} parent=0 // pred_check_branch
    %27 = sbr.rel (0) target = $region29
  $region28: #{lstm_model_forward.1} parent=0 // pred_region
    _
  $region29: #{lstm_model_forward.1} parent=0 // pred_fallthru
    _
  // Predicated region
  $region30: #{lstm_model_forward.1} parent=0 // pred_check
    _
  $region31: #{lstm_model_forward.1} parent=0 // pred_check_branch
    %29 = sbr.rel (0) target = $region33
  $region32: #{lstm_model_forward.1} parent=0 // pred_region
    _
  $region33: #{lstm_model_forward.1} parent=0 // pred_fallthru
    _
  // Predicated region
  $region34: #{lstm_model_forward.1} parent=0 // pred_check
    _
  $region35: #{lstm_model_forward.1} parent=0 // pred_check_branch
    %31 = sbr.rel (0) target = $region37
  $region36: #{lstm_model_forward.1} parent=0 // pred_region
    _
  $region37: #{lstm_model_forward.1} parent=0 // pred_fallthru
    _
  %v33 = vld [vmem:[%s1] sm:$0xf]
  %v34 = vld [vmem:[%s1 + $0x4] sm:$0xf]
  %v35 = vld [vmem:[%s4] sm:$0xf]
  %v36 = vld [vmem:[%s4 + $0x4] sm:$0xf]
  %v37 = vld [vmem:[%s4 + $0x8] sm:$0xf]
  %v38 = vld [vmem:[%s4 + $0xc] sm:$0xf]
  %v39 = vld [vmem:[%s2] sm:$0xf]
  %v40 = vld [vmem:[%s2 + $0x4] sm:$0xf]
  %v41 = vld [vmem:[%s2 + $0x8] sm:$0xf]
  %v42 = vld [vmem:[%s2 + $0xc] sm:$0xf]
  %v43 = vld [vmem:[%s5] sm:$0xf]
  %v44 = vld [vmem:[%s5 + $0x4] sm:$0xf]
  %v45 = vld [vmem:[%s5 + $0x8] sm:$0xf]
  %v46 = vld [vmem:[%s5 + $0xc] sm:$0xf]
  %v47 = vld [vmem:[%s3] sm:$0x1]
  %v48 = vld [vmem:[%s6] sm:$0x1]
  %v49 = vld [vmem:[%s0] sm:$0xff]
  %v50 = vld [vmem:[%s0 + $0x8] sm:$0xff]
  %v51 = vld [vmem:[%s0 + $0x10] sm:$0xff]
  %v52 = vld [vmem:[%s0 + $0x18] sm:$0xff]
  %v53 = vld [vmem:[%s0 + $0x20] sm:$0xff]
  %v54 = vld [vmem:[%s0 + $0x28] sm:$0xff]
  %v55 = vld [vmem:[%s0 + $0x30] sm:$0xff]
  %v56 = vld [vmem:[%s0 + $0x38] sm:$0xff]
  %v57 = vpack.c.bf16 %v50, %v49
  %v58 = vpack.c.bf16 %v52, %v51
  %v59 = vpack.c.bf16 %v54, %v53
  %v60 = vpack.c.bf16 %v56, %v55
  %v62 = vlaneseq
  %v63 = vshrl.u32 %v62, 7
  %v64 = vsub.s32 0, %v63
  %v65 = vrot.slane %v47, %v64
  %v69 = vunpack.c.l.b16 %v33
  %v70 = vunpack.c.l.b16 %v34
  %v71 = vpack.c.b16 %v70, %v69
  %vm73 = vcmask 130048
  %v75 = vsel %vm73, %v57, 0
  %v78 = vsel %vm73, %v58, 0
  %v81 = vsel %vm73, %v59, 0
  %v84 = vsel %vm73, %v60, 0
  %86 = vmatprep.subr.bf16.mxu0 0
  %87 = vmatpush1.bf16.msra.mxu0 0
  %88 = vmatprep.subr.bf16.mxu0 0
  %89 = vmatpush1.bf16.msra.mxu0 0
  %90 = vmatprep.subr.bf16.mxu0 0
  %91 = vmatpush1.bf16.msra.mxu0 0
  %92 = vmatprep.subr.bf16.mxu0 0
  %93 = vmatpush1.bf16.msra.mxu0 0
  %94 = vmatprep.subr.bf16.mxu0 0
  %95 = vmatpush1.bf16.msra.mxu0 0
  %96 = vmatprep.subr.bf16.mxu0 0
  %97 = vmatpush1.bf16.msra.mxu0 0
  %98 = vmatprep.subr.bf16.mxu0 0
  %99 = vmatpush1.bf16.msra.mxu0 0
  %100 = vmatprep.subr.bf16.mxu0 0
  %101 = vmatpush1.bf16.msra.mxu0 %v71
  %102 = vmatprep.subr.bf16.mxu0 0
  %103 = vmatpush2.bf16.msra.mxu0 0
  %104 = vmatprep.subr.bf16.mxu0 0
  %105 = vmatpush2.bf16.msra.mxu0 0
  %106 = vmatprep.subr.bf16.mxu0 0
  %107 = vmatpush2.bf16.msra.mxu0 0
  %108 = vmatprep.subr.bf16.mxu0 0
  %109 = vmatpush2.bf16.msra.mxu0 0
  %110 = vmatprep.subr.bf16.mxu0 0
  %111 = vmatpush2.bf16.msra.mxu0 0
  %112 = vmatprep.subr.bf16.mxu0 0
  %113 = vmatpush2.bf16.msra.mxu0 0
  %114 = vmatprep.subr.bf16.mxu0 0
  %115 = vmatpush2.bf16.msra.mxu0 0
  %116 = vmatprep.subr.bf16.mxu0 0
  %117 = vmatpush2.bf16.msra.mxu0 0
  %118 = vmatprep.mubr.bf16.mxu0 0
  %119 = vmatmul.mubr.bf16.gmra.mxu0 %v75
  %v120 = vpop.f32.mrf.mxu0
  %v121 = vadd.f32 %v65, %v120
  %v122 = vpop.f32.mrf.mxu0
  %v123 = vpop.f32.mrf.mxu0
  %v124 = vadd.f32 %v65, %v123
  %v125 = vpop.f32.mrf.mxu0
  %126 = vmatprep.mubr.bf16.mxu0 0
  %127 = vmatmul.mubr.bf16.gmra.mxu0 %v78
  %v128 = vpop.f32.mrf.mxu0
  %v129 = vadd.f32 %v65, %v128
  %v130 = vpop.f32.mrf.mxu0
  %v131 = vpop.f32.mrf.mxu0
  %v132 = vadd.f32 %v65, %v131
  %v133 = vpop.f32.mrf.mxu0
  %134 = vmatprep.mubr.bf16.mxu0 0
  %135 = vmatmul.mubr.bf16.gmra.mxu0 %v81
  %v136 = vpop.f32.mrf.mxu0
  %v137 = vadd.f32 %v65, %v136
  %v138 = vpop.f32.mrf.mxu0
  %v139 = vpop.f32.mrf.mxu0
  %v140 = vadd.f32 %v65, %v139
  %v141 = vpop.f32.mrf.mxu0
  %142 = vmatprep.mubr.bf16.mxu0 0
  %143 = vmatmul.mubr.bf16.gmra.mxu0 %v84
  %v144 = vpop.f32.mrf.mxu0
  %v145 = vadd.f32 %v65, %v144
  %v146 = vpop.f32.mrf.mxu0
  %v147 = vpop.f32.mrf.mxu0
  %v148 = vadd.f32 %v65, %v147
  %v149 = vpop.f32.mrf.mxu0
  %150 = vdwg.mxu0
  %v155 = vunpack.c.l.b16 %v39
  %v156 = vunpack.c.l.b16 %v40
  %v157 = vunpack.c.l.b16 %v41
  %v158 = vunpack.c.l.b16 %v42
  %v159 = vpack.c.b16 %v156, %v155
  %v160 = vpack.c.b16 %v158, %v157
  %vm163 = vcmask 261120
  %v165 = vsel %vm163, 0, 0
  %167 = vmatprep.subr.bf16.mxu0 0
  %168 = vmatpush1.bf16.msra.mxu0 0
  %169 = vmatprep.subr.bf16.mxu0 0
  %170 = vmatpush1.bf16.msra.mxu0 0
  %171 = vmatprep.subr.bf16.mxu0 0
  %172 = vmatpush1.bf16.msra.mxu0 0
  %173 = vmatprep.subr.bf16.mxu0 0
  %174 = vmatpush1.bf16.msra.mxu0 0
  %175 = vmatprep.subr.bf16.mxu0 0
  %176 = vmatpush1.bf16.msra.mxu0 0
  %177 = vmatprep.subr.bf16.mxu0 0
  %178 = vmatpush1.bf16.msra.mxu0 0
  %179 = vmatprep.subr.bf16.mxu0 0
  %180 = vmatpush1.bf16.msra.mxu0 %v160
  %181 = vmatprep.subr.bf16.mxu0 0
  %182 = vmatpush1.bf16.msra.mxu0 %v159
  %183 = vmatprep.subr.bf16.mxu0 0
  %184 = vmatpush2.bf16.msra.mxu0 0
  %185 = vmatprep.subr.bf16.mxu0 0
  %186 = vmatpush2.bf16.msra.mxu0 0
  %187 = vmatprep.subr.bf16.mxu0 0
  %188 = vmatpush2.bf16.msra.mxu0 0
  %189 = vmatprep.subr.bf16.mxu0 0
  %190 = vmatpush2.bf16.msra.mxu0 0
  %191 = vmatprep.subr.bf16.mxu0 0
  %192 = vmatpush2.bf16.msra.mxu0 0
  %193 = vmatprep.subr.bf16.mxu0 0
  %194 = vmatpush2.bf16.msra.mxu0 0
  %195 = vmatprep.subr.bf16.mxu0 0
  %196 = vmatpush2.bf16.msra.mxu0 0
  %197 = vmatprep.subr.bf16.mxu0 0
  %198 = vmatpush2.bf16.msra.mxu0 0
  %199 = vmatprep.mubr.bf16.mxu0 0
  %200 = vmatmul.mubr.bf16.gmra.mxu0 %v165
  %v201 = vpop.f32.mrf.mxu0
  %v202 = vadd.f32 0.0, %v201
  %v203 = vpop.f32.mrf.mxu0
  %v204 = vpop.f32.mrf.mxu0
  %v205 = vpop.f32.mrf.mxu0
  %206 = vdwg.mxu0
  %v207 = vadd.f32 %v121, %v202
  %v208 = vxor.u32 %v207, 2147483648
  %v209 = vmul.f32 %v208, 1.442695
  %v210 = vpow.pop %v209
  %v211 = vadd.f32 %v210, 1.0
  %v212 = vrcp.pop %v211
  %v213 = vmul.f32 1.0, %v212
  %v214 = vtanh.pop %v207
  %v215 = vmul.f32 %v213, 0.0
  %217 = vrot.lane.b32.xlu0 %v214, 32
  %v218 = vpop.permute.xlu0 %217
  %v220 = vmul.f32 %v213, %v218
  %222 = vrot.lane.b32.xlu0 %v220, 32
  %v223 = vpop.permute.xlu0 %222
  %v225 = vadd.f32 %v215, %v223
  %v226 = vtanh.pop %v225
  %228 = vrot.lane.b32.xlu0 %v226, 32
  %v229 = vpop.permute.xlu0 %228
  %v231 = vmul.f32 %v213, %v229
  %v232 = vpack.c.bf16 %v231, %v231
  %v234 = vlaneseq
  %v235 = vshrl.u32 %v234, 7
  %v236 = vsub.s32 0, %v235
  %v237 = vrot.slane %v48, %v236
  %240 = vrot.lane.b32.xlu0 %v232, 64
  %v241 = vpop.permute.xlu0 %240
  %v246 = vunpack.c.l.b16 %v35
  %v247 = vunpack.c.l.b16 %v36
  %v248 = vunpack.c.l.b16 %v37
  %v249 = vunpack.c.l.b16 %v38
  %v250 = vpack.c.b16 %v247, %v246
  %v251 = vpack.c.b16 %v249, %v248
  %v255 = vsel %vm163, %v241, 0
  %257 = vmatprep.subr.bf16.mxu0 0
  %258 = vmatpush1.bf16.msra.mxu0 0
  %259 = vmatprep.subr.bf16.mxu0 0
  %260 = vmatpush1.bf16.msra.mxu0 0
  %261 = vmatprep.subr.bf16.mxu0 0
  %262 = vmatpush1.bf16.msra.mxu0 0
  %263 = vmatprep.subr.bf16.mxu0 0
  %264 = vmatpush1.bf16.msra.mxu0 0
  %265 = vmatprep.subr.bf16.mxu0 0
  %266 = vmatpush1.bf16.msra.mxu0 0
  %267 = vmatprep.subr.bf16.mxu0 0
  %268 = vmatpush1.bf16.msra.mxu0 0
  %269 = vmatprep.subr.bf16.mxu0 0
  %270 = vmatpush1.bf16.msra.mxu0 %v251
  %271 = vmatprep.subr.bf16.mxu0 0
  %272 = vmatpush1.bf16.msra.mxu0 %v250
  %273 = vmatprep.subr.bf16.mxu0 0
  %274 = vmatpush2.bf16.msra.mxu0 0
  %275 = vmatprep.subr.bf16.mxu0 0
  %276 = vmatpush2.bf16.msra.mxu0 0
  %277 = vmatprep.subr.bf16.mxu0 0
  %278 = vmatpush2.bf16.msra.mxu0 0
  %279 = vmatprep.subr.bf16.mxu0 0
  %280 = vmatpush2.bf16.msra.mxu0 0
  %281 = vmatprep.subr.bf16.mxu0 0
  %282 = vmatpush2.bf16.msra.mxu0 0
  %283 = vmatprep.subr.bf16.mxu0 0
  %284 = vmatpush2.bf16.msra.mxu0 0
  %285 = vmatprep.subr.bf16.mxu0 0
  %286 = vmatpush2.bf16.msra.mxu0 0
  %287 = vmatprep.subr.bf16.mxu0 0
  %288 = vmatpush2.bf16.msra.mxu0 0
  %289 = vmatprep.mubr.bf16.mxu0 0
  %290 = vmatmul.mubr.bf16.gmra.mxu0 %v255
  %v291 = vpop.f32.mrf.mxu0
  %v292 = vadd.f32 %v237, %v291
  %v293 = vpop.f32.mrf.mxu0
  %v294 = vpop.f32.mrf.mxu0
  %v295 = vpop.f32.mrf.mxu0
  %296 = vdwg.mxu0
  %v301 = vunpack.c.l.b16 %v43
  %v302 = vunpack.c.l.b16 %v44
  %v303 = vunpack.c.l.b16 %v45
  %v304 = vunpack.c.l.b16 %v46
  %v305 = vpack.c.b16 %v302, %v301
  %v306 = vpack.c.b16 %v304, %v303
  %309 = vmatprep.subr.bf16.mxu0 0
  %310 = vmatpush1.bf16.msra.mxu0 0
  %311 = vmatprep.subr.bf16.mxu0 0
  %312 = vmatpush1.bf16.msra.mxu0 0
  %313 = vmatprep.subr.bf16.mxu0 0
  %314 = vmatpush1.bf16.msra.mxu0 0
  %315 = vmatprep.subr.bf16.mxu0 0
  %316 = vmatpush1.bf16.msra.mxu0 0
  %317 = vmatprep.subr.bf16.mxu0 0
  %318 = vmatpush1.bf16.msra.mxu0 0
  %319 = vmatprep.subr.bf16.mxu0 0
  %320 = vmatpush1.bf16.msra.mxu0 0
  %321 = vmatprep.subr.bf16.mxu0 0
  %322 = vmatpush1.bf16.msra.mxu0 %v306
  %323 = vmatprep.subr.bf16.mxu0 0
  %324 = vmatpush1.bf16.msra.mxu0 %v305
  %325 = vmatprep.subr.bf16.mxu0 0
  %326 = vmatpush2.bf16.msra.mxu0 0
  %327 = vmatprep.subr.bf16.mxu0 0
  %328 = vmatpush2.bf16.msra.mxu0 0
  %329 = vmatprep.subr.bf16.mxu0 0
  %330 = vmatpush2.bf16.msra.mxu0 0
  %331 = vmatprep.subr.bf16.mxu0 0
  %332 = vmatpush2.bf16.msra.mxu0 0
  %333 = vmatprep.subr.bf16.mxu0 0
  %334 = vmatpush2.bf16.msra.mxu0 0
  %335 = vmatprep.subr.bf16.mxu0 0
  %336 = vmatpush2.bf16.msra.mxu0 0
  %337 = vmatprep.subr.bf16.mxu0 0
  %338 = vmatpush2.bf16.msra.mxu0 0
  %339 = vmatprep.subr.bf16.mxu0 0
  %340 = vmatpush2.bf16.msra.mxu0 0
  %341 = vmatprep.mubr.bf16.mxu0 0
  %342 = vmatmul.mubr.bf16.gmra.mxu0 %v165
  %v343 = vpop.f32.mrf.mxu0
  %v344 = vadd.f32 0.0, %v343
  %v345 = vpop.f32.mrf.mxu0
  %v346 = vpop.f32.mrf.mxu0
  %v347 = vpop.f32.mrf.mxu0
  %348 = vdwg.mxu0
  %v349 = vadd.f32 %v292, %v344
  %v350 = vxor.u32 %v349, 2147483648
  %v351 = vmul.f32 %v350, 1.442695
  %v352 = vpow.pop %v351
  %v353 = vadd.f32 %v352, 1.0
  %v354 = vrcp.pop %v353
  %v355 = vmul.f32 1.0, %v354
  %v356 = vtanh.pop %v349
  %v357 = vmul.f32 %v355, 0.0
  %359 = vrot.lane.b32.xlu0 %v356, 32
  %v360 = vpop.permute.xlu0 %359
  %v362 = vmul.f32 %v355, %v360
  %364 = vrot.lane.b32.xlu0 %v362, 32
  %v365 = vpop.permute.xlu0 %364
  %v367 = vadd.f32 %v357, %v365
  %v368 = vtanh.pop %v367
  %370 = vrot.lane.b32.xlu0 %v368, 32
  %v371 = vpop.permute.xlu0 %370
  %v373 = vmul.f32 %v355, %v371
  %375 = vrot.lane.b32.xlu0 %v373, 64
  %v376 = vpop.permute.xlu0 %375
  %378 = vst.msk [vmem:[#allocation2] sm:$0xff] %vm163, %v376
  %379 = vmatprep.subr.bf16.mxu0 0
  %380 = vmatpush1.bf16.msra.mxu0 0
  %381 = vmatprep.subr.bf16.mxu0 0
  %382 = vmatpush1.bf16.msra.mxu0 0
  %383 = vmatprep.subr.bf16.mxu0 0
  %384 = vmatpush1.bf16.msra.mxu0 0
  %385 = vmatprep.subr.bf16.mxu0 0
  %386 = vmatpush1.bf16.msra.mxu0 0
  %387 = vmatprep.subr.bf16.mxu0 0
  %388 = vmatpush1.bf16.msra.mxu0 0
  %389 = vmatprep.subr.bf16.mxu0 0
  %390 = vmatpush1.bf16.msra.mxu0 0
  %391 = vmatprep.subr.bf16.mxu0 0
  %392 = vmatpush1.bf16.msra.mxu0 %v160
  %393 = vmatprep.subr.bf16.mxu0 0
  %394 = vmatpush1.bf16.msra.mxu0 %v159
  %395 = vmatprep.subr.bf16.mxu0 0
  %396 = vmatpush2.bf16.msra.mxu0 0
  %397 = vmatprep.subr.bf16.mxu0 0
  %398 = vmatpush2.bf16.msra.mxu0 0
  %399 = vmatprep.subr.bf16.mxu0 0
  %400 = vmatpush2.bf16.msra.mxu0 0
  %401 = vmatprep.subr.bf16.mxu0 0
  %402 = vmatpush2.bf16.msra.mxu0 0
  %403 = vmatprep.subr.bf16.mxu0 0
  %404 = vmatpush2.bf16.msra.mxu0 0
  %405 = vmatprep.subr.bf16.mxu0 0
  %406 = vmatpush2.bf16.msra.mxu0 0
  %407 = vmatprep.subr.bf16.mxu0 0
  %408 = vmatpush2.bf16.msra.mxu0 0
  %409 = vmatprep.subr.bf16.mxu0 0
  %410 = vmatpush2.bf16.msra.mxu0 0
  %411 = vmatprep.mubr.bf16.mxu0 0
  %412 = vmatmul.mubr.bf16.gmra.mxu0 %v255
  %v413 = vpop.f32.mrf.mxu0
  %v414 = vadd.f32 0.0, %v413
  %v415 = vpop.f32.mrf.mxu0
  %v416 = vpop.f32.mrf.mxu0
  %v417 = vpop.f32.mrf.mxu0
  %418 = vdwg.mxu0
  %v419 = vadd.f32 %v124, %v414
  %v420 = vxor.u32 %v419, 2147483648
  %v421 = vmul.f32 %v420, 1.442695
  %v422 = vpow.pop %v421
  %v423 = vadd.f32 %v422, 1.0
  %v424 = vrcp.pop %v423
  %v425 = vmul.f32 1.0, %v424
  %v426 = vtanh.pop %v419
  %v427 = vmul.f32 %v425, %v225
  %429 = vrot.lane.b32.xlu0 %v426, 32
  %v430 = vpop.permute.xlu0 %429
  %v432 = vmul.f32 %v425, %v430
  %434 = vrot.lane.b32.xlu0 %v432, 32
  %v435 = vpop.permute.xlu0 %434
  %v437 = vadd.f32 %v427, %v435
  %v438 = vtanh.pop %v437
  %440 = vrot.lane.b32.xlu0 %v438, 32
  %v441 = vpop.permute.xlu0 %440
  %v443 = vmul.f32 %v425, %v441
  %v444 = vpack.c.bf16 %v443, %v443
  %446 = vrot.lane.b32.xlu0 %v444, 64
  %v447 = vpop.permute.xlu0 %446
  %v449 = vsel %vm163, %v447, 0
  %451 = vmatprep.subr.bf16.mxu0 0
  %452 = vmatpush1.bf16.msra.mxu0 0
  %453 = vmatprep.subr.bf16.mxu0 0
  %454 = vmatpush1.bf16.msra.mxu0 0
  %455 = vmatprep.subr.bf16.mxu0 0
  %456 = vmatpush1.bf16.msra.mxu0 0
  %457 = vmatprep.subr.bf16.mxu0 0
  %458 = vmatpush1.bf16.msra.mxu0 0
  %459 = vmatprep.subr.bf16.mxu0 0
  %460 = vmatpush1.bf16.msra.mxu0 0
  %461 = vmatprep.subr.bf16.mxu0 0
  %462 = vmatpush1.bf16.msra.mxu0 0
  %463 = vmatprep.subr.bf16.mxu0 0
  %464 = vmatpush1.bf16.msra.mxu0 %v251
  %465 = vmatprep.subr.bf16.mxu0 0
  %466 = vmatpush1.bf16.msra.mxu0 %v250
  %467 = vmatprep.subr.bf16.mxu0 0
  %468 = vmatpush2.bf16.msra.mxu0 0
  %469 = vmatprep.subr.bf16.mxu0 0
  %470 = vmatpush2.bf16.msra.mxu0 0
  %471 = vmatprep.subr.bf16.mxu0 0
  %472 = vmatpush2.bf16.msra.mxu0 0
  %473 = vmatprep.subr.bf16.mxu0 0
  %474 = vmatpush2.bf16.msra.mxu0 0
  %475 = vmatprep.subr.bf16.mxu0 0
  %476 = vmatpush2.bf16.msra.mxu0 0
  %477 = vmatprep.subr.bf16.mxu0 0
  %478 = vmatpush2.bf16.msra.mxu0 0
  %479 = vmatprep.subr.bf16.mxu0 0
  %480 = vmatpush2.bf16.msra.mxu0 0
  %481 = vmatprep.subr.bf16.mxu0 0
  %482 = vmatpush2.bf16.msra.mxu0 0
  %483 = vmatprep.mubr.bf16.mxu0 0
  %484 = vmatmul.mubr.bf16.gmra.mxu0 %v449
  %v485 = vpop.f32.mrf.mxu0
  %v486 = vadd.f32 %v237, %v485
  %v487 = vpop.f32.mrf.mxu0
  %v488 = vpop.f32.mrf.mxu0
  %v489 = vpop.f32.mrf.mxu0
  %490 = vdwg.mxu0
  %v491 = vpack.c.bf16 %v373, %v373
  %493 = vrot.lane.b32.xlu0 %v491, 64
  %v494 = vpop.permute.xlu0 %493
  %v496 = vsel %vm163, %v494, 0
  %498 = vmatprep.subr.bf16.mxu0 0
  %499 = vmatpush1.bf16.msra.mxu0 0
  %500 = vmatprep.subr.bf16.mxu0 0
  %501 = vmatpush1.bf16.msra.mxu0 0
  %502 = vmatprep.subr.bf16.mxu0 0
  %503 = vmatpush1.bf16.msra.mxu0 0
  %504 = vmatprep.subr.bf16.mxu0 0
  %505 = vmatpush1.bf16.msra.mxu0 0
  %506 = vmatprep.subr.bf16.mxu0 0
  %507 = vmatpush1.bf16.msra.mxu0 0
  %508 = vmatprep.subr.bf16.mxu0 0
  %509 = vmatpush1.bf16.msra.mxu0 0
  %510 = vmatprep.subr.bf16.mxu0 0
  %511 = vmatpush1.bf16.msra.mxu0 %v306
  %512 = vmatprep.subr.bf16.mxu0 0
  %513 = vmatpush1.bf16.msra.mxu0 %v305
  %514 = vmatprep.subr.bf16.mxu0 0
  %515 = vmatpush2.bf16.msra.mxu0 0
  %516 = vmatprep.subr.bf16.mxu0 0
  %517 = vmatpush2.bf16.msra.mxu0 0
  %518 = vmatprep.subr.bf16.mxu0 0
  %519 = vmatpush2.bf16.msra.mxu0 0
  %520 = vmatprep.subr.bf16.mxu0 0
  %521 = vmatpush2.bf16.msra.mxu0 0
  %522 = vmatprep.subr.bf16.mxu0 0
  %523 = vmatpush2.bf16.msra.mxu0 0
  %524 = vmatprep.subr.bf16.mxu0 0
  %525 = vmatpush2.bf16.msra.mxu0 0
  %526 = vmatprep.subr.bf16.mxu0 0
  %527 = vmatpush2.bf16.msra.mxu0 0
  %528 = vmatprep.subr.bf16.mxu0 0
  %529 = vmatpush2.bf16.msra.mxu0 0
  %530 = vmatprep.mubr.bf16.mxu0 0
  %531 = vmatmul.mubr.bf16.gmra.mxu0 %v496
  %v532 = vpop.f32.mrf.mxu0
  %v533 = vadd.f32 0.0, %v532
  %v534 = vpop.f32.mrf.mxu0
  %v535 = vpop.f32.mrf.mxu0
  %v536 = vpop.f32.mrf.mxu0
  %537 = vdwg.mxu0
  %v538 = vadd.f32 %v486, %v533
  %v539 = vxor.u32 %v538, 2147483648
  %v540 = vmul.f32 %v539, 1.442695
  %v541 = vpow.pop %v540
  %v542 = vadd.f32 %v541, 1.0
  %v543 = vrcp.pop %v542
  %v544 = vmul.f32 1.0, %v543
  %v545 = vtanh.pop %v538
  %v546 = vmul.f32 %v544, %v367
  %548 = vrot.lane.b32.xlu0 %v545, 32
  %v549 = vpop.permute.xlu0 %548
  %v551 = vmul.f32 %v544, %v549
  %553 = vrot.lane.b32.xlu0 %v551, 32
  %v554 = vpop.permute.xlu0 %553
  %v556 = vadd.f32 %v546, %v554
  %v557 = vtanh.pop %v556
  %559 = vrot.lane.b32.xlu0 %v557, 32
  %v560 = vpop.permute.xlu0 %559
  %v562 = vmul.f32 %v544, %v560
  %564 = vrot.lane.b32.xlu0 %v562, 64
  %v565 = vpop.permute.xlu0 %564
  %567 = vst.msk [vmem:[#allocation2 + $0x8] sm:$0xff] %vm163, %v565
  %568 = vmatprep.subr.bf16.mxu0 0
  %569 = vmatpush1.bf16.msra.mxu0 0
  %570 = vmatprep.subr.bf16.mxu0 0
  %571 = vmatpush1.bf16.msra.mxu0 0
  %572 = vmatprep.subr.bf16.mxu0 0
  %573 = vmatpush1.bf16.msra.mxu0 0
  %574 = vmatprep.subr.bf16.mxu0 0
  %575 = vmatpush1.bf16.msra.mxu0 0
  %576 = vmatprep.subr.bf16.mxu0 0
  %577 = vmatpush1.bf16.msra.mxu0 0
  %578 = vmatprep.subr.bf16.mxu0 0
  %579 = vmatpush1.bf16.msra.mxu0 0
  %580 = vmatprep.subr.bf16.mxu0 0
  %581 = vmatpush1.bf16.msra.mxu0 %v160
  %582 = vmatprep.subr.bf16.mxu0 0
  %583 = vmatpush1.bf16.msra.mxu0 %v159
  %584 = vmatprep.subr.bf16.mxu0 0
  %585 = vmatpush2.bf16.msra.mxu0 0
  %586 = vmatprep.subr.bf16.mxu0 0
  %587 = vmatpush2.bf16.msra.mxu0 0
  %588 = vmatprep.subr.bf16.mxu0 0
  %589 = vmatpush2.bf16.msra.mxu0 0
  %590 = vmatprep.subr.bf16.mxu0 0
  %591 = vmatpush2.bf16.msra.mxu0 0
  %592 = vmatprep.subr.bf16.mxu0 0
  %593 = vmatpush2.bf16.msra.mxu0 0
  %594 = vmatprep.subr.bf16.mxu0 0
  %595 = vmatpush2.bf16.msra.mxu0 0
  %596 = vmatprep.subr.bf16.mxu0 0
  %597 = vmatpush2.bf16.msra.mxu0 0
  %598 = vmatprep.subr.bf16.mxu0 0
  %599 = vmatpush2.bf16.msra.mxu0 0
  %600 = vmatprep.mubr.bf16.mxu0 0
  %601 = vmatmul.mubr.bf16.gmra.mxu0 %v449
  %v602 = vpop.f32.mrf.mxu0
  %v603 = vadd.f32 0.0, %v602
  %v604 = vpop.f32.mrf.mxu0
  %v605 = vpop.f32.mrf.mxu0
  %v606 = vpop.f32.mrf.mxu0
  %607 = vdwg.mxu0
  %v608 = vadd.f32 %v129, %v603
  %v609 = vxor.u32 %v608, 2147483648
  %v610 = vmul.f32 %v609, 1.442695
  %v611 = vpow.pop %v610
  %v612 = vadd.f32 %v611, 1.0
  %v613 = vrcp.pop %v612
  %v614 = vmul.f32 1.0, %v613
  %v615 = vtanh.pop %v608
  %v616 = vmul.f32 %v614, %v437
  %618 = vrot.lane.b32.xlu0 %v615, 32
  %v619 = vpop.permute.xlu0 %618
  %v621 = vmul.f32 %v614, %v619
  %623 = vrot.lane.b32.xlu0 %v621, 32
  %v624 = vpop.permute.xlu0 %623
  %v626 = vadd.f32 %v616, %v624
  %v627 = vtanh.pop %v626
  %629 = vrot.lane.b32.xlu0 %v627, 32
  %v630 = vpop.permute.xlu0 %629
  %v632 = vmul.f32 %v614, %v630
  %v633 = vpack.c.bf16 %v632, %v632
  %635 = vrot.lane.b32.xlu0 %v633, 64
  %v636 = vpop.permute.xlu0 %635
  %v638 = vsel %vm163, %v636, 0
  %640 = vmatprep.subr.bf16.mxu0 0
  %641 = vmatpush1.bf16.msra.mxu0 0
  %642 = vmatprep.subr.bf16.mxu0 0
  %643 = vmatpush1.bf16.msra.mxu0 0
  %644 = vmatprep.subr.bf16.mxu0 0
  %645 = vmatpush1.bf16.msra.mxu0 0
  %646 = vmatprep.subr.bf16.mxu0 0
  %647 = vmatpush1.bf16.msra.mxu0 0
  %648 = vmatprep.subr.bf16.mxu0 0
  %649 = vmatpush1.bf16.msra.mxu0 0
  %650 = vmatprep.subr.bf16.mxu0 0
  %651 = vmatpush1.bf16.msra.mxu0 0
  %652 = vmatprep.subr.bf16.mxu0 0
  %653 = vmatpush1.bf16.msra.mxu0 %v251
  %654 = vmatprep.subr.bf16.mxu0 0
  %655 = vmatpush1.bf16.msra.mxu0 %v250
  %656 = vmatprep.subr.bf16.mxu0 0
  %657 = vmatpush2.bf16.msra.mxu0 0
  %658 = vmatprep.subr.bf16.mxu0 0
  %659 = vmatpush2.bf16.msra.mxu0 0
  %660 = vmatprep.subr.bf16.mxu0 0
  %661 = vmatpush2.bf16.msra.mxu0 0
  %662 = vmatprep.subr.bf16.mxu0 0
  %663 = vmatpush2.bf16.msra.mxu0 0
  %664 = vmatprep.subr.bf16.mxu0 0
  %665 = vmatpush2.bf16.msra.mxu0 0
  %666 = vmatprep.subr.bf16.mxu0 0
  %667 = vmatpush2.bf16.msra.mxu0 0
  %668 = vmatprep.subr.bf16.mxu0 0
  %669 = vmatpush2.bf16.msra.mxu0 0
  %670 = vmatprep.subr.bf16.mxu0 0
  %671 = vmatpush2.bf16.msra.mxu0 0
  %672 = vmatprep.mubr.bf16.mxu0 0
  %673 = vmatmul.mubr.bf16.gmra.mxu0 %v638
  %v674 = vpop.f32.mrf.mxu0
  %v675 = vadd.f32 %v237, %v674
  %v676 = vpop.f32.mrf.mxu0
  %v677 = vpop.f32.mrf.mxu0
  %v678 = vpop.f32.mrf.mxu0
  %679 = vdwg.mxu0
  %v680 = vpack.c.bf16 %v562, %v562
  %682 = vrot.lane.b32.xlu0 %v680, 64
  %v683 = vpop.permute.xlu0 %682
  %v685 = vsel %vm163, %v683, 0
  %687 = vmatprep.subr.bf16.mxu0 0
  %688 = vmatpush1.bf16.msra.mxu0 0
  %689 = vmatprep.subr.bf16.mxu0 0
  %690 = vmatpush1.bf16.msra.mxu0 0
  %691 = vmatprep.subr.bf16.mxu0 0
  %692 = vmatpush1.bf16.msra.mxu0 0
  %693 = vmatprep.subr.bf16.mxu0 0
  %694 = vmatpush1.bf16.msra.mxu0 0
  %695 = vmatprep.subr.bf16.mxu0 0
  %696 = vmatpush1.bf16.msra.mxu0 0
  %697 = vmatprep.subr.bf16.mxu0 0
  %698 = vmatpush1.bf16.msra.mxu0 0
  %699 = vmatprep.subr.bf16.mxu0 0
  %700 = vmatpush1.bf16.msra.mxu0 %v306
  %701 = vmatprep.subr.bf16.mxu0 0
  %702 = vmatpush1.bf16.msra.mxu0 %v305
  %703 = vmatprep.subr.bf16.mxu0 0
  %704 = vmatpush2.bf16.msra.mxu0 0
  %705 = vmatprep.subr.bf16.mxu0 0
  %706 = vmatpush2.bf16.msra.mxu0 0
  %707 = vmatprep.subr.bf16.mxu0 0
  %708 = vmatpush2.bf16.msra.mxu0 0
  %709 = vmatprep.subr.bf16.mxu0 0
  %710 = vmatpush2.bf16.msra.mxu0 0
  %711 = vmatprep.subr.bf16.mxu0 0
  %712 = vmatpush2.bf16.msra.mxu0 0
  %713 = vmatprep.subr.bf16.mxu0 0
  %714 = vmatpush2.bf16.msra.mxu0 0
  %715 = vmatprep.subr.bf16.mxu0 0
  %716 = vmatpush2.bf16.msra.mxu0 0
  %717 = vmatprep.subr.bf16.mxu0 0
  %718 = vmatpush2.bf16.msra.mxu0 0
  %719 = vmatprep.mubr.bf16.mxu0 0
  %720 = vmatmul.mubr.bf16.gmra.mxu0 %v685
  %v721 = vpop.f32.mrf.mxu0
  %v722 = vadd.f32 0.0, %v721
  %v723 = vpop.f32.mrf.mxu0
  %v724 = vpop.f32.mrf.mxu0
  %v725 = vpop.f32.mrf.mxu0
  %726 = vdwg.mxu0
  %v727 = vadd.f32 %v675, %v722
  %v728 = vxor.u32 %v727, 2147483648
  %v729 = vmul.f32 %v728, 1.442695
  %v730 = vpow.pop %v729
  %v731 = vadd.f32 %v730, 1.0
  %v732 = vrcp.pop %v731
  %v733 = vmul.f32 1.0, %v732
  %v734 = vtanh.pop %v727
  %v735 = vmul.f32 %v733, %v556
  %737 = vrot.lane.b32.xlu0 %v734, 32
  %v738 = vpop.permute.xlu0 %737
  %v740 = vmul.f32 %v733, %v738
  %742 = vrot.lane.b32.xlu0 %v740, 32
  %v743 = vpop.permute.xlu0 %742
  %v745 = vadd.f32 %v735, %v743
  %v746 = vtanh.pop %v745
  %748 = vrot.lane.b32.xlu0 %v746, 32
  %v749 = vpop.permute.xlu0 %748
  %v751 = vmul.f32 %v733, %v749
  %753 = vrot.lane.b32.xlu0 %v751, 64
  %v754 = vpop.permute.xlu0 %753
  %756 = vst.msk [vmem:[#allocation2 + $0x10] sm:$0xff] %vm163, %v754
  %757 = vmatprep.subr.bf16.mxu0 0
  %758 = vmatpush1.bf16.msra.mxu0 0
  %759 = vmatprep.subr.bf16.mxu0 0
  %760 = vmatpush1.bf16.msra.mxu0 0
  %761 = vmatprep.subr.bf16.mxu0 0
  %762 = vmatpush1.bf16.msra.mxu0 0
  %763 = vmatprep.subr.bf16.mxu0 0
  %764 = vmatpush1.bf16.msra.mxu0 0
  %765 = vmatprep.subr.bf16.mxu0 0
  %766 = vmatpush1.bf16.msra.mxu0 0
  %767 = vmatprep.subr.bf16.mxu0 0
  %768 = vmatpush1.bf16.msra.mxu0 0
  %769 = vmatprep.subr.bf16.mxu0 0
  %770 = vmatpush1.bf16.msra.mxu0 %v160
  %771 = vmatprep.subr.bf16.mxu0 0
  %772 = vmatpush1.bf16.msra.mxu0 %v159
  %773 = vmatprep.subr.bf16.mxu0 0
  %774 = vmatpush2.bf16.msra.mxu0 0
  %775 = vmatprep.subr.bf16.mxu0 0
  %776 = vmatpush2.bf16.msra.mxu0 0
  %777 = vmatprep.subr.bf16.mxu0 0
  %778 = vmatpush2.bf16.msra.mxu0 0
  %779 = vmatprep.subr.bf16.mxu0 0
  %780 = vmatpush2.bf16.msra.mxu0 0
  %781 = vmatprep.subr.bf16.mxu0 0
  %782 = vmatpush2.bf16.msra.mxu0 0
  %783 = vmatprep.subr.bf16.mxu0 0
  %784 = vmatpush2.bf16.msra.mxu0 0
  %785 = vmatprep.subr.bf16.mxu0 0
  %786 = vmatpush2.bf16.msra.mxu0 0
  %787 = vmatprep.subr.bf16.mxu0 0
  %788 = vmatpush2.bf16.msra.mxu0 0
  %789 = vmatprep.mubr.bf16.mxu0 0
  %790 = vmatmul.mubr.bf16.gmra.mxu0 %v638
  %v791 = vpop.f32.mrf.mxu0
  %v792 = vadd.f32 0.0, %v791
  %v793 = vpop.f32.mrf.mxu0
  %v794 = vpop.f32.mrf.mxu0
  %v795 = vpop.f32.mrf.mxu0
  %796 = vdwg.mxu0
  %v797 = vadd.f32 %v132, %v792
  %v798 = vxor.u32 %v797, 2147483648
  %v799 = vmul.f32 %v798, 1.442695
  %v800 = vpow.pop %v799
  %v801 = vadd.f32 %v800, 1.0
  %v802 = vrcp.pop %v801
  %v803 = vmul.f32 1.0, %v802
  %v804 = vtanh.pop %v797
  %v805 = vmul.f32 %v803, %v626
  %807 = vrot.lane.b32.xlu0 %v804, 32
  %v808 = vpop.permute.xlu0 %807
  %v810 = vmul.f32 %v803, %v808
  %812 = vrot.lane.b32.xlu0 %v810, 32
  %v813 = vpop.permute.xlu0 %812
  %v815 = vadd.f32 %v805, %v813
  %v816 = vtanh.pop %v815
  %818 = vrot.lane.b32.xlu0 %v816, 32
  %v819 = vpop.permute.xlu0 %818
  %v821 = vmul.f32 %v803, %v819
  %v822 = vpack.c.bf16 %v821, %v821
  %824 = vrot.lane.b32.xlu0 %v822, 64
  %v825 = vpop.permute.xlu0 %824
  %v827 = vsel %vm163, %v825, 0
  %829 = vmatprep.subr.bf16.mxu0 0
  %830 = vmatpush1.bf16.msra.mxu0 0
  %831 = vmatprep.subr.bf16.mxu0 0
  %832 = vmatpush1.bf16.msra.mxu0 0
  %833 = vmatprep.subr.bf16.mxu0 0
  %834 = vmatpush1.bf16.msra.mxu0 0
  %835 = vmatprep.subr.bf16.mxu0 0
  %836 = vmatpush1.bf16.msra.mxu0 0
  %837 = vmatprep.subr.bf16.mxu0 0
  %838 = vmatpush1.bf16.msra.mxu0 0
  %839 = vmatprep.subr.bf16.mxu0 0
  %840 = vmatpush1.bf16.msra.mxu0 0
  %841 = vmatprep.subr.bf16.mxu0 0
  %842 = vmatpush1.bf16.msra.mxu0 %v251
  %843 = vmatprep.subr.bf16.mxu0 0
  %844 = vmatpush1.bf16.msra.mxu0 %v250
  %845 = vmatprep.subr.bf16.mxu0 0
  %846 = vmatpush2.bf16.msra.mxu0 0
  %847 = vmatprep.subr.bf16.mxu0 0
  %848 = vmatpush2.bf16.msra.mxu0 0
  %849 = vmatprep.subr.bf16.mxu0 0
  %850 = vmatpush2.bf16.msra.mxu0 0
  %851 = vmatprep.subr.bf16.mxu0 0
  %852 = vmatpush2.bf16.msra.mxu0 0
  %853 = vmatprep.subr.bf16.mxu0 0
  %854 = vmatpush2.bf16.msra.mxu0 0
  %855 = vmatprep.subr.bf16.mxu0 0
  %856 = vmatpush2.bf16.msra.mxu0 0
  %857 = vmatprep.subr.bf16.mxu0 0
  %858 = vmatpush2.bf16.msra.mxu0 0
  %859 = vmatprep.subr.bf16.mxu0 0
  %860 = vmatpush2.bf16.msra.mxu0 0
  %861 = vmatprep.mubr.bf16.mxu0 0
  %862 = vmatmul.mubr.bf16.gmra.mxu0 %v827
  %v863 = vpop.f32.mrf.mxu0
  %v864 = vadd.f32 %v237, %v863
  %v865 = vpop.f32.mrf.mxu0
  %v866 = vpop.f32.mrf.mxu0
  %v867 = vpop.f32.mrf.mxu0
  %868 = vdwg.mxu0
  %v869 = vpack.c.bf16 %v751, %v751
  %871 = vrot.lane.b32.xlu0 %v869, 64
  %v872 = vpop.permute.xlu0 %871
  %v874 = vsel %vm163, %v872, 0
  %876 = vmatprep.subr.bf16.mxu0 0
  %877 = vmatpush1.bf16.msra.mxu0 0
  %878 = vmatprep.subr.bf16.mxu0 0
  %879 = vmatpush1.bf16.msra.mxu0 0
  %880 = vmatprep.subr.bf16.mxu0 0
  %881 = vmatpush1.bf16.msra.mxu0 0
  %882 = vmatprep.subr.bf16.mxu0 0
  %883 = vmatpush1.bf16.msra.mxu0 0
  %884 = vmatprep.subr.bf16.mxu0 0
  %885 = vmatpush1.bf16.msra.mxu0 0
  %886 = vmatprep.subr.bf16.mxu0 0
  %887 = vmatpush1.bf16.msra.mxu0 0
  %888 = vmatprep.subr.bf16.mxu0 0
  %889 = vmatpush1.bf16.msra.mxu0 %v306
  %890 = vmatprep.subr.bf16.mxu0 0
  %891 = vmatpush1.bf16.msra.mxu0 %v305
  %892 = vmatprep.subr.bf16.mxu0 0
  %893 = vmatpush2.bf16.msra.mxu0 0
  %894 = vmatprep.subr.bf16.mxu0 0
  %895 = vmatpush2.bf16.msra.mxu0 0
  %896 = vmatprep.subr.bf16.mxu0 0
  %897 = vmatpush2.bf16.msra.mxu0 0
  %898 = vmatprep.subr.bf16.mxu0 0
  %899 = vmatpush2.bf16.msra.mxu0 0
  %900 = vmatprep.subr.bf16.mxu0 0
  %901 = vmatpush2.bf16.msra.mxu0 0
  %902 = vmatprep.subr.bf16.mxu0 0
  %903 = vmatpush2.bf16.msra.mxu0 0
  %904 = vmatprep.subr.bf16.mxu0 0
  %905 = vmatpush2.bf16.msra.mxu0 0
  %906 = vmatprep.subr.bf16.mxu0 0
  %907 = vmatpush2.bf16.msra.mxu0 0
  %908 = vmatprep.mubr.bf16.mxu0 0
  %909 = vmatmul.mubr.bf16.gmra.mxu0 %v874
  %v910 = vpop.f32.mrf.mxu0
  %v911 = vadd.f32 0.0, %v910
  %v912 = vpop.f32.mrf.mxu0
  %v913 = vpop.f32.mrf.mxu0
  %v914 = vpop.f32.mrf.mxu0
  %915 = vdwg.mxu0
  %v916 = vadd.f32 %v864, %v911
  %v917 = vxor.u32 %v916, 2147483648
  %v918 = vmul.f32 %v917, 1.442695
  %v919 = vpow.pop %v918
  %v920 = vadd.f32 %v919, 1.0
  %v921 = vrcp.pop %v920
  %v922 = vmul.f32 1.0, %v921
  %v923 = vtanh.pop %v916
  %v924 = vmul.f32 %v922, %v745
  %926 = vrot.lane.b32.xlu0 %v923, 32
  %v927 = vpop.permute.xlu0 %926
  %v929 = vmul.f32 %v922, %v927
  %931 = vrot.lane.b32.xlu0 %v929, 32
  %v932 = vpop.permute.xlu0 %931
  %v934 = vadd.f32 %v924, %v932
  %v935 = vtanh.pop %v934
  %937 = vrot.lane.b32.xlu0 %v935, 32
  %v938 = vpop.permute.xlu0 %937
  %v940 = vmul.f32 %v922, %v938
  %942 = vrot.lane.b32.xlu0 %v940, 64
  %v943 = vpop.permute.xlu0 %942
  %945 = vst.msk [vmem:[#allocation2 + $0x18] sm:$0xff] %vm163, %v943
  %946 = vmatprep.subr.bf16.mxu0 0
  %947 = vmatpush1.bf16.msra.mxu0 0
  %948 = vmatprep.subr.bf16.mxu0 0
  %949 = vmatpush1.bf16.msra.mxu0 0
  %950 = vmatprep.subr.bf16.mxu0 0
  %951 = vmatpush1.bf16.msra.mxu0 0
  %952 = vmatprep.subr.bf16.mxu0 0
  %953 = vmatpush1.bf16.msra.mxu0 0
  %954 = vmatprep.subr.bf16.mxu0 0
  %955 = vmatpush1.bf16.msra.mxu0 0
  %956 = vmatprep.subr.bf16.mxu0 0
  %957 = vmatpush1.bf16.msra.mxu0 0
  %958 = vmatprep.subr.bf16.mxu0 0
  %959 = vmatpush1.bf16.msra.mxu0 %v160
  %960 = vmatprep.subr.bf16.mxu0 0
  %961 = vmatpush1.bf16.msra.mxu0 %v159
  %962 = vmatprep.subr.bf16.mxu0 0
  %963 = vmatpush2.bf16.msra.mxu0 0
  %964 = vmatprep.subr.bf16.mxu0 0
  %965 = vmatpush2.bf16.msra.mxu0 0
  %966 = vmatprep.subr.bf16.mxu0 0
  %967 = vmatpush2.bf16.msra.mxu0 0
  %968 = vmatprep.subr.bf16.mxu0 0
  %969 = vmatpush2.bf16.msra.mxu0 0
  %970 = vmatprep.subr.bf16.mxu0 0
  %971 = vmatpush2.bf16.msra.mxu0 0
  %972 = vmatprep.subr.bf16.mxu0 0
  %973 = vmatpush2.bf16.msra.mxu0 0
  %974 = vmatprep.subr.bf16.mxu0 0
  %975 = vmatpush2.bf16.msra.mxu0 0
  %976 = vmatprep.subr.bf16.mxu0 0
  %977 = vmatpush2.bf16.msra.mxu0 0
  %978 = vmatprep.mubr.bf16.mxu0 0
  %979 = vmatmul.mubr.bf16.gmra.mxu0 %v827
  %v980 = vpop.f32.mrf.mxu0
  %v981 = vadd.f32 0.0, %v980
  %v982 = vpop.f32.mrf.mxu0
  %v983 = vpop.f32.mrf.mxu0
  %v984 = vpop.f32.mrf.mxu0
  %985 = vdwg.mxu0
  %v986 = vadd.f32 %v137, %v981
  %v987 = vxor.u32 %v986, 2147483648
  %v988 = vmul.f32 %v987, 1.442695
  %v989 = vpow.pop %v988
  %v990 = vadd.f32 %v989, 1.0
  %v991 = vrcp.pop %v990
  %v992 = vmul.f32 1.0, %v991
  %v993 = vtanh.pop %v986
  %v994 = vmul.f32 %v992, %v815
  %996 = vrot.lane.b32.xlu0 %v993, 32
  %v997 = vpop.permute.xlu0 %996
  %v999 = vmul.f32 %v992, %v997
  %1001 = vrot.lane.b32.xlu0 %v999, 32
  %v1002 = vpop.permute.xlu0 %1001
  %v1004 = vadd.f32 %v994, %v1002
  %v1005 = vtanh.pop %v1004
  %1007 = vrot.lane.b32.xlu0 %v1005, 32
  %v1008 = vpop.permute.xlu0 %1007
  %v1010 = vmul.f32 %v992, %v1008
  %v1011 = vpack.c.bf16 %v1010, %v1010
  %1013 = vrot.lane.b32.xlu0 %v1011, 64
  %v1014 = vpop.permute.xlu0 %1013
  %v1016 = vsel %vm163, %v1014, 0
  %1018 = vmatprep.subr.bf16.mxu0 0
  %1019 = vmatpush1.bf16.msra.mxu0 0
  %1020 = vmatprep.subr.bf16.mxu0 0
  %1021 = vmatpush1.bf16.msra.mxu0 0
  %1022 = vmatprep.subr.bf16.mxu0 0
  %1023 = vmatpush1.bf16.msra.mxu0 0
  %1024 = vmatprep.subr.bf16.mxu0 0
  %1025 = vmatpush1.bf16.msra.mxu0 0
  %1026 = vmatprep.subr.bf16.mxu0 0
  %1027 = vmatpush1.bf16.msra.mxu0 0
  %1028 = vmatprep.subr.bf16.mxu0 0
  %1029 = vmatpush1.bf16.msra.mxu0 0
  %1030 = vmatprep.subr.bf16.mxu0 0
  %1031 = vmatpush1.bf16.msra.mxu0 %v251
  %1032 = vmatprep.subr.bf16.mxu0 0
  %1033 = vmatpush1.bf16.msra.mxu0 %v250
  %1034 = vmatprep.subr.bf16.mxu0 0
  %1035 = vmatpush2.bf16.msra.mxu0 0
  %1036 = vmatprep.subr.bf16.mxu0 0
  %1037 = vmatpush2.bf16.msra.mxu0 0
  %1038 = vmatprep.subr.bf16.mxu0 0
  %1039 = vmatpush2.bf16.msra.mxu0 0
  %1040 = vmatprep.subr.bf16.mxu0 0
  %1041 = vmatpush2.bf16.msra.mxu0 0
  %1042 = vmatprep.subr.bf16.mxu0 0
  %1043 = vmatpush2.bf16.msra.mxu0 0
  %1044 = vmatprep.subr.bf16.mxu0 0
  %1045 = vmatpush2.bf16.msra.mxu0 0
  %1046 = vmatprep.subr.bf16.mxu0 0
  %1047 = vmatpush2.bf16.msra.mxu0 0
  %1048 = vmatprep.subr.bf16.mxu0 0
  %1049 = vmatpush2.bf16.msra.mxu0 0
  %1050 = vmatprep.mubr.bf16.mxu0 0
  %1051 = vmatmul.mubr.bf16.gmra.mxu0 %v1016
  %v1052 = vpop.f32.mrf.mxu0
  %v1053 = vadd.f32 %v237, %v1052
  %v1054 = vpop.f32.mrf.mxu0
  %v1055 = vpop.f32.mrf.mxu0
  %v1056 = vpop.f32.mrf.mxu0
  %1057 = vdwg.mxu0
  %v1058 = vpack.c.bf16 %v940, %v940
  %1060 = vrot.lane.b32.xlu0 %v1058, 64
  %v1061 = vpop.permute.xlu0 %1060
  %v1063 = vsel %vm163, %v1061, 0
  %1065 = vmatprep.subr.bf16.mxu0 0
  %1066 = vmatpush1.bf16.msra.mxu0 0
  %1067 = vmatprep.subr.bf16.mxu0 0
  %1068 = vmatpush1.bf16.msra.mxu0 0
  %1069 = vmatprep.subr.bf16.mxu0 0
  %1070 = vmatpush1.bf16.msra.mxu0 0
  %1071 = vmatprep.subr.bf16.mxu0 0
  %1072 = vmatpush1.bf16.msra.mxu0 0
  %1073 = vmatprep.subr.bf16.mxu0 0
  %1074 = vmatpush1.bf16.msra.mxu0 0
  %1075 = vmatprep.subr.bf16.mxu0 0
  %1076 = vmatpush1.bf16.msra.mxu0 0
  %1077 = vmatprep.subr.bf16.mxu0 0
  %1078 = vmatpush1.bf16.msra.mxu0 %v306
  %1079 = vmatprep.subr.bf16.mxu0 0
  %1080 = vmatpush1.bf16.msra.mxu0 %v305
  %1081 = vmatprep.subr.bf16.mxu0 0
  %1082 = vmatpush2.bf16.msra.mxu0 0
  %1083 = vmatprep.subr.bf16.mxu0 0
  %1084 = vmatpush2.bf16.msra.mxu0 0
  %1085 = vmatprep.subr.bf16.mxu0 0
  %1086 = vmatpush2.bf16.msra.mxu0 0
  %1087 = vmatprep.subr.bf16.mxu0 0
  %1088 = vmatpush2.bf16.msra.mxu0 0
  %1089 = vmatprep.subr.bf16.mxu0 0
  %1090 = vmatpush2.bf16.msra.mxu0 0
  %1091 = vmatprep.subr.bf16.mxu0 0
  %1092 = vmatpush2.bf16.msra.mxu0 0
  %1093 = vmatprep.subr.bf16.mxu0 0
  %1094 = vmatpush2.bf16.msra.mxu0 0
  %1095 = vmatprep.subr.bf16.mxu0 0
  %1096 = vmatpush2.bf16.msra.mxu0 0
  %1097 = vmatprep.mubr.bf16.mxu0 0
  %1098 = vmatmul.mubr.bf16.gmra.mxu0 %v1063
  %v1099 = vpop.f32.mrf.mxu0
  %v1100 = vadd.f32 0.0, %v1099
  %v1101 = vpop.f32.mrf.mxu0
  %v1102 = vpop.f32.mrf.mxu0
  %v1103 = vpop.f32.mrf.mxu0
  %1104 = vdwg.mxu0
  %v1105 = vadd.f32 %v1053, %v1100
  %v1106 = vxor.u32 %v1105, 2147483648
  %v1107 = vmul.f32 %v1106, 1.442695
  %v1108 = vpow.pop %v1107
  %v1109 = vadd.f32 %v1108, 1.0
  %v1110 = vrcp.pop %v1109
  %v1111 = vmul.f32 1.0, %v1110
  %v1112 = vtanh.pop %v1105
  %v1113 = vmul.f32 %v1111, %v934
  %1115 = vrot.lane.b32.xlu0 %v1112, 32
  %v1116 = vpop.permute.xlu0 %1115
  %v1118 = vmul.f32 %v1111, %v1116
  %1120 = vrot.lane.b32.xlu0 %v1118, 32
  %v1121 = vpop.permute.xlu0 %1120
  %v1123 = vadd.f32 %v1113, %v1121
  %v1124 = vtanh.pop %v1123
  %1126 = vrot.lane.b32.xlu0 %v1124, 32
  %v1127 = vpop.permute.xlu0 %1126
  %v1129 = vmul.f32 %v1111, %v1127
  %1131 = vrot.lane.b32.xlu0 %v1129, 64
  %v1132 = vpop.permute.xlu0 %1131
  %1134 = vst.msk [vmem:[#allocation2 + $0x20] sm:$0xff] %vm163, %v1132
  %1135 = vmatprep.subr.bf16.mxu0 0
  %1136 = vmatpush1.bf16.msra.mxu0 0
  %1137 = vmatprep.subr.bf16.mxu0 0
  %1138 = vmatpush1.bf16.msra.mxu0 0
  %1139 = vmatprep.subr.bf16.mxu0 0
  %1140 = vmatpush1.bf16.msra.mxu0 0
  %1141 = vmatprep.subr.bf16.mxu0 0
  %1142 = vmatpush1.bf16.msra.mxu0 0
  %1143 = vmatprep.subr.bf16.mxu0 0
  %1144 = vmatpush1.bf16.msra.mxu0 0
  %1145 = vmatprep.subr.bf16.mxu0 0
  %1146 = vmatpush1.bf16.msra.mxu0 0
  %1147 = vmatprep.subr.bf16.mxu0 0
  %1148 = vmatpush1.bf16.msra.mxu0 %v160
  %1149 = vmatprep.subr.bf16.mxu0 0
  %1150 = vmatpush1.bf16.msra.mxu0 %v159
  %1151 = vmatprep.subr.bf16.mxu0 0
  %1152 = vmatpush2.bf16.msra.mxu0 0
  %1153 = vmatprep.subr.bf16.mxu0 0
  %1154 = vmatpush2.bf16.msra.mxu0 0
  %1155 = vmatprep.subr.bf16.mxu0 0
  %1156 = vmatpush2.bf16.msra.mxu0 0
  %1157 = vmatprep.subr.bf16.mxu0 0
  %1158 = vmatpush2.bf16.msra.mxu0 0
  %1159 = vmatprep.subr.bf16.mxu0 0
  %1160 = vmatpush2.bf16.msra.mxu0 0
  %1161 = vmatprep.subr.bf16.mxu0 0
  %1162 = vmatpush2.bf16.msra.mxu0 0
  %1163 = vmatprep.subr.bf16.mxu0 0
  %1164 = vmatpush2.bf16.msra.mxu0 0
  %1165 = vmatprep.subr.bf16.mxu0 0
  %1166 = vmatpush2.bf16.msra.mxu0 0
  %1167 = vmatprep.mubr.bf16.mxu0 0
  %1168 = vmatmul.mubr.bf16.gmra.mxu0 %v1016
  %v1169 = vpop.f32.mrf.mxu0
  %v1170 = vadd.f32 0.0, %v1169
  %v1171 = vpop.f32.mrf.mxu0
  %v1172 = vpop.f32.mrf.mxu0
  %v1173 = vpop.f32.mrf.mxu0
  %1174 = vdwg.mxu0
  %v1175 = vadd.f32 %v140, %v1170
  %v1176 = vxor.u32 %v1175, 2147483648
  %v1177 = vmul.f32 %v1176, 1.442695
  %v1178 = vpow.pop %v1177
  %v1179 = vadd.f32 %v1178, 1.0
  %v1180 = vrcp.pop %v1179
  %v1181 = vmul.f32 1.0, %v1180
  %v1182 = vtanh.pop %v1175
  %v1183 = vmul.f32 %v1181, %v1004
  %1185 = vrot.lane.b32.xlu0 %v1182, 32
  %v1186 = vpop.permute.xlu0 %1185
  %v1188 = vmul.f32 %v1181, %v1186
  %1190 = vrot.lane.b32.xlu0 %v1188, 32
  %v1191 = vpop.permute.xlu0 %1190
  %v1193 = vadd.f32 %v1183, %v1191
  %v1194 = vtanh.pop %v1193
  %1196 = vrot.lane.b32.xlu0 %v1194, 32
  %v1197 = vpop.permute.xlu0 %1196
  %v1199 = vmul.f32 %v1181, %v1197
  %v1200 = vpack.c.bf16 %v1199, %v1199
  %1202 = vrot.lane.b32.xlu0 %v1200, 64
  %v1203 = vpop.permute.xlu0 %1202
  %v1205 = vsel %vm163, %v1203, 0
  %1207 = vmatprep.subr.bf16.mxu0 0
  %1208 = vmatpush1.bf16.msra.mxu0 0
  %1209 = vmatprep.subr.bf16.mxu0 0
  %1210 = vmatpush1.bf16.msra.mxu0 0
  %1211 = vmatprep.subr.bf16.mxu0 0
  %1212 = vmatpush1.bf16.msra.mxu0 0
  %1213 = vmatprep.subr.bf16.mxu0 0
  %1214 = vmatpush1.bf16.msra.mxu0 0
  %1215 = vmatprep.subr.bf16.mxu0 0
  %1216 = vmatpush1.bf16.msra.mxu0 0
  %1217 = vmatprep.subr.bf16.mxu0 0
  %1218 = vmatpush1.bf16.msra.mxu0 0
  %1219 = vmatprep.subr.bf16.mxu0 0
  %1220 = vmatpush1.bf16.msra.mxu0 %v251
  %1221 = vmatprep.subr.bf16.mxu0 0
  %1222 = vmatpush1.bf16.msra.mxu0 %v250
  %1223 = vmatprep.subr.bf16.mxu0 0
  %1224 = vmatpush2.bf16.msra.mxu0 0
  %1225 = vmatprep.subr.bf16.mxu0 0
  %1226 = vmatpush2.bf16.msra.mxu0 0
  %1227 = vmatprep.subr.bf16.mxu0 0
  %1228 = vmatpush2.bf16.msra.mxu0 0
  %1229 = vmatprep.subr.bf16.mxu0 0
  %1230 = vmatpush2.bf16.msra.mxu0 0
  %1231 = vmatprep.subr.bf16.mxu0 0
  %1232 = vmatpush2.bf16.msra.mxu0 0
  %1233 = vmatprep.subr.bf16.mxu0 0
  %1234 = vmatpush2.bf16.msra.mxu0 0
  %1235 = vmatprep.subr.bf16.mxu0 0
  %1236 = vmatpush2.bf16.msra.mxu0 0
  %1237 = vmatprep.subr.bf16.mxu0 0
  %1238 = vmatpush2.bf16.msra.mxu0 0
  %1239 = vmatprep.mubr.bf16.mxu0 0
  %1240 = vmatmul.mubr.bf16.gmra.mxu0 %v1205
  %v1241 = vpop.f32.mrf.mxu0
  %v1242 = vadd.f32 %v237, %v1241
  %v1243 = vpop.f32.mrf.mxu0
  %v1244 = vpop.f32.mrf.mxu0
  %v1245 = vpop.f32.mrf.mxu0
  %1246 = vdwg.mxu0
  %v1247 = vpack.c.bf16 %v1129, %v1129
  %1249 = vrot.lane.b32.xlu0 %v1247, 64
  %v1250 = vpop.permute.xlu0 %1249
  %v1252 = vsel %vm163, %v1250, 0
  %1254 = vmatprep.subr.bf16.mxu0 0
  %1255 = vmatpush1.bf16.msra.mxu0 0
  %1256 = vmatprep.subr.bf16.mxu0 0
  %1257 = vmatpush1.bf16.msra.mxu0 0
  %1258 = vmatprep.subr.bf16.mxu0 0
  %1259 = vmatpush1.bf16.msra.mxu0 0
  %1260 = vmatprep.subr.bf16.mxu0 0
  %1261 = vmatpush1.bf16.msra.mxu0 0
  %1262 = vmatprep.subr.bf16.mxu0 0
  %1263 = vmatpush1.bf16.msra.mxu0 0
  %1264 = vmatprep.subr.bf16.mxu0 0
  %1265 = vmatpush1.bf16.msra.mxu0 0
  %1266 = vmatprep.subr.bf16.mxu0 0
  %1267 = vmatpush1.bf16.msra.mxu0 %v306
  %1268 = vmatprep.subr.bf16.mxu0 0
  %1269 = vmatpush1.bf16.msra.mxu0 %v305
  %1270 = vmatprep.subr.bf16.mxu0 0
  %1271 = vmatpush2.bf16.msra.mxu0 0
  %1272 = vmatprep.subr.bf16.mxu0 0
  %1273 = vmatpush2.bf16.msra.mxu0 0
  %1274 = vmatprep.subr.bf16.mxu0 0
  %1275 = vmatpush2.bf16.msra.mxu0 0
  %1276 = vmatprep.subr.bf16.mxu0 0
  %1277 = vmatpush2.bf16.msra.mxu0 0
  %1278 = vmatprep.subr.bf16.mxu0 0
  %1279 = vmatpush2.bf16.msra.mxu0 0
  %1280 = vmatprep.subr.bf16.mxu0 0
  %1281 = vmatpush2.bf16.msra.mxu0 0
  %1282 = vmatprep.subr.bf16.mxu0 0
  %1283 = vmatpush2.bf16.msra.mxu0 0
  %1284 = vmatprep.subr.bf16.mxu0 0
  %1285 = vmatpush2.bf16.msra.mxu0 0
  %1286 = vmatprep.mubr.bf16.mxu0 0
  %1287 = vmatmul.mubr.bf16.gmra.mxu0 %v1252
  %v1288 = vpop.f32.mrf.mxu0
  %v1289 = vadd.f32 0.0, %v1288
  %v1290 = vpop.f32.mrf.mxu0
  %v1291 = vpop.f32.mrf.mxu0
  %v1292 = vpop.f32.mrf.mxu0
  %1293 = vdwg.mxu0
  %v1294 = vadd.f32 %v1242, %v1289
  %v1295 = vxor.u32 %v1294, 2147483648
  %v1296 = vmul.f32 %v1295, 1.442695
  %v1297 = vpow.pop %v1296
  %v1298 = vadd.f32 %v1297, 1.0
  %v1299 = vrcp.pop %v1298
  %v1300 = vmul.f32 1.0, %v1299
  %v1301 = vtanh.pop %v1294
  %v1302 = vmul.f32 %v1300, %v1123
  %1304 = vrot.lane.b32.xlu0 %v1301, 32
  %v1305 = vpop.permute.xlu0 %1304
  %v1307 = vmul.f32 %v1300, %v1305
  %1309 = vrot.lane.b32.xlu0 %v1307, 32
  %v1310 = vpop.permute.xlu0 %1309
  %v1312 = vadd.f32 %v1302, %v1310
  %v1313 = vtanh.pop %v1312
  %1315 = vrot.lane.b32.xlu0 %v1313, 32
  %v1316 = vpop.permute.xlu0 %1315
  %v1318 = vmul.f32 %v1300, %v1316
  %1320 = vrot.lane.b32.xlu0 %v1318, 64
  %v1321 = vpop.permute.xlu0 %1320
  %1323 = vst.msk [vmem:[#allocation2 + $0x28] sm:$0xff] %vm163, %v1321
  %1324 = vmatprep.subr.bf16.mxu0 0
  %1325 = vmatpush1.bf16.msra.mxu0 0
  %1326 = vmatprep.subr.bf16.mxu0 0
  %1327 = vmatpush1.bf16.msra.mxu0 0
  %1328 = vmatprep.subr.bf16.mxu0 0
  %1329 = vmatpush1.bf16.msra.mxu0 0
  %1330 = vmatprep.subr.bf16.mxu0 0
  %1331 = vmatpush1.bf16.msra.mxu0 0
  %1332 = vmatprep.subr.bf16.mxu0 0
  %1333 = vmatpush1.bf16.msra.mxu0 0
  %1334 = vmatprep.subr.bf16.mxu0 0
  %1335 = vmatpush1.bf16.msra.mxu0 0
  %1336 = vmatprep.subr.bf16.mxu0 0
  %1337 = vmatpush1.bf16.msra.mxu0 %v160
  %1338 = vmatprep.subr.bf16.mxu0 0
  %1339 = vmatpush1.bf16.msra.mxu0 %v159
  %1340 = vmatprep.subr.bf16.mxu0 0
  %1341 = vmatpush2.bf16.msra.mxu0 0
  %1342 = vmatprep.subr.bf16.mxu0 0
  %1343 = vmatpush2.bf16.msra.mxu0 0
  %1344 = vmatprep.subr.bf16.mxu0 0
  %1345 = vmatpush2.bf16.msra.mxu0 0
  %1346 = vmatprep.subr.bf16.mxu0 0
  %1347 = vmatpush2.bf16.msra.mxu0 0
  %1348 = vmatprep.subr.bf16.mxu0 0
  %1349 = vmatpush2.bf16.msra.mxu0 0
  %1350 = vmatprep.subr.bf16.mxu0 0
  %1351 = vmatpush2.bf16.msra.mxu0 0
  %1352 = vmatprep.subr.bf16.mxu0 0
  %1353 = vmatpush2.bf16.msra.mxu0 0
  %1354 = vmatprep.subr.bf16.mxu0 0
  %1355 = vmatpush2.bf16.msra.mxu0 0
  %1356 = vmatprep.mubr.bf16.mxu0 0
  %1357 = vmatmul.mubr.bf16.gmra.mxu0 %v1205
  %v1358 = vpop.f32.mrf.mxu0
  %v1359 = vadd.f32 0.0, %v1358
  %v1360 = vpop.f32.mrf.mxu0
  %v1361 = vpop.f32.mrf.mxu0
  %v1362 = vpop.f32.mrf.mxu0
  %1363 = vdwg.mxu0
  %v1364 = vadd.f32 %v145, %v1359
  %v1365 = vxor.u32 %v1364, 2147483648
  %v1366 = vmul.f32 %v1365, 1.442695
  %v1367 = vpow.pop %v1366
  %v1368 = vadd.f32 %v1367, 1.0
  %v1369 = vrcp.pop %v1368
  %v1370 = vmul.f32 1.0, %v1369
  %v1371 = vtanh.pop %v1364
  %v1372 = vmul.f32 %v1370, %v1193
  %1374 = vrot.lane.b32.xlu0 %v1371, 32
  %v1375 = vpop.permute.xlu0 %1374
  %v1377 = vmul.f32 %v1370, %v1375
  %1379 = vrot.lane.b32.xlu0 %v1377, 32
  %v1380 = vpop.permute.xlu0 %1379
  %v1382 = vadd.f32 %v1372, %v1380
  %v1383 = vtanh.pop %v1382
  %1385 = vrot.lane.b32.xlu0 %v1383, 32
  %v1386 = vpop.permute.xlu0 %1385
  %v1388 = vmul.f32 %v1370, %v1386
  %v1389 = vpack.c.bf16 %v1388, %v1388
  %1391 = vrot.lane.b32.xlu0 %v1389, 64
  %v1392 = vpop.permute.xlu0 %1391
  %v1394 = vsel %vm163, %v1392, 0
  %1396 = vmatprep.subr.bf16.mxu0 0
  %1397 = vmatpush1.bf16.msra.mxu0 0
  %1398 = vmatprep.subr.bf16.mxu0 0
  %1399 = vmatpush1.bf16.msra.mxu0 0
  %1400 = vmatprep.subr.bf16.mxu0 0
  %1401 = vmatpush1.bf16.msra.mxu0 0
  %1402 = vmatprep.subr.bf16.mxu0 0
  %1403 = vmatpush1.bf16.msra.mxu0 0
  %1404 = vmatprep.subr.bf16.mxu0 0
  %1405 = vmatpush1.bf16.msra.mxu0 0
  %1406 = vmatprep.subr.bf16.mxu0 0
  %1407 = vmatpush1.bf16.msra.mxu0 0
  %1408 = vmatprep.subr.bf16.mxu0 0
  %1409 = vmatpush1.bf16.msra.mxu0 %v251
  %1410 = vmatprep.subr.bf16.mxu0 0
  %1411 = vmatpush1.bf16.msra.mxu0 %v250
  %1412 = vmatprep.subr.bf16.mxu0 0
  %1413 = vmatpush2.bf16.msra.mxu0 0
  %1414 = vmatprep.subr.bf16.mxu0 0
  %1415 = vmatpush2.bf16.msra.mxu0 0
  %1416 = vmatprep.subr.bf16.mxu0 0
  %1417 = vmatpush2.bf16.msra.mxu0 0
  %1418 = vmatprep.subr.bf16.mxu0 0
  %1419 = vmatpush2.bf16.msra.mxu0 0
  %1420 = vmatprep.subr.bf16.mxu0 0
  %1421 = vmatpush2.bf16.msra.mxu0 0
  %1422 = vmatprep.subr.bf16.mxu0 0
  %1423 = vmatpush2.bf16.msra.mxu0 0
  %1424 = vmatprep.subr.bf16.mxu0 0
  %1425 = vmatpush2.bf16.msra.mxu0 0
  %1426 = vmatprep.subr.bf16.mxu0 0
  %1427 = vmatpush2.bf16.msra.mxu0 0
  %1428 = vmatprep.mubr.bf16.mxu0 0
  %1429 = vmatmul.mubr.bf16.gmra.mxu0 %v1394
  %v1430 = vpop.f32.mrf.mxu0
  %v1431 = vadd.f32 %v237, %v1430
  %v1432 = vpop.f32.mrf.mxu0
  %v1433 = vpop.f32.mrf.mxu0
  %v1434 = vpop.f32.mrf.mxu0
  %1435 = vdwg.mxu0
  %v1436 = vpack.c.bf16 %v1318, %v1318
  %1438 = vrot.lane.b32.xlu0 %v1436, 64
  %v1439 = vpop.permute.xlu0 %1438
  %v1441 = vsel %vm163, %v1439, 0
  %1443 = vmatprep.subr.bf16.mxu0 0
  %1444 = vmatpush1.bf16.msra.mxu0 0
  %1445 = vmatprep.subr.bf16.mxu0 0
  %1446 = vmatpush1.bf16.msra.mxu0 0
  %1447 = vmatprep.subr.bf16.mxu0 0
  %1448 = vmatpush1.bf16.msra.mxu0 0
  %1449 = vmatprep.subr.bf16.mxu0 0
  %1450 = vmatpush1.bf16.msra.mxu0 0
  %1451 = vmatprep.subr.bf16.mxu0 0
  %1452 = vmatpush1.bf16.msra.mxu0 0
  %1453 = vmatprep.subr.bf16.mxu0 0
  %1454 = vmatpush1.bf16.msra.mxu0 0
  %1455 = vmatprep.subr.bf16.mxu0 0
  %1456 = vmatpush1.bf16.msra.mxu0 %v306
  %1457 = vmatprep.subr.bf16.mxu0 0
  %1458 = vmatpush1.bf16.msra.mxu0 %v305
  %1459 = vmatprep.subr.bf16.mxu0 0
  %1460 = vmatpush2.bf16.msra.mxu0 0
  %1461 = vmatprep.subr.bf16.mxu0 0
  %1462 = vmatpush2.bf16.msra.mxu0 0
  %1463 = vmatprep.subr.bf16.mxu0 0
  %1464 = vmatpush2.bf16.msra.mxu0 0
  %1465 = vmatprep.subr.bf16.mxu0 0
  %1466 = vmatpush2.bf16.msra.mxu0 0
  %1467 = vmatprep.subr.bf16.mxu0 0
  %1468 = vmatpush2.bf16.msra.mxu0 0
  %1469 = vmatprep.subr.bf16.mxu0 0
  %1470 = vmatpush2.bf16.msra.mxu0 0
  %1471 = vmatprep.subr.bf16.mxu0 0
  %1472 = vmatpush2.bf16.msra.mxu0 0
  %1473 = vmatprep.subr.bf16.mxu0 0
  %1474 = vmatpush2.bf16.msra.mxu0 0
  %1475 = vmatprep.mubr.bf16.mxu0 0
  %1476 = vmatmul.mubr.bf16.gmra.mxu0 %v1441
  %v1477 = vpop.f32.mrf.mxu0
  %v1478 = vadd.f32 0.0, %v1477
  %v1479 = vpop.f32.mrf.mxu0
  %v1480 = vpop.f32.mrf.mxu0
  %v1481 = vpop.f32.mrf.mxu0
  %1482 = vdwg.mxu0
  %v1483 = vadd.f32 %v1431, %v1478
  %v1484 = vxor.u32 %v1483, 2147483648
  %v1485 = vmul.f32 %v1484, 1.442695
  %v1486 = vpow.pop %v1485
  %v1487 = vadd.f32 %v1486, 1.0
  %v1488 = vrcp.pop %v1487
  %v1489 = vmul.f32 1.0, %v1488
  %v1490 = vtanh.pop %v1483
  %v1491 = vmul.f32 %v1489, %v1312
  %1493 = vrot.lane.b32.xlu0 %v1490, 32
  %v1494 = vpop.permute.xlu0 %1493
  %v1496 = vmul.f32 %v1489, %v1494
  %1498 = vrot.lane.b32.xlu0 %v1496, 32
  %v1499 = vpop.permute.xlu0 %1498
  %v1501 = vadd.f32 %v1491, %v1499
  %v1502 = vtanh.pop %v1501
  %1504 = vrot.lane.b32.xlu0 %v1502, 32
  %v1505 = vpop.permute.xlu0 %1504
  %v1507 = vmul.f32 %v1489, %v1505
  %1509 = vrot.lane.b32.xlu0 %v1507, 64
  %v1510 = vpop.permute.xlu0 %1509
  %1512 = vst.msk [vmem:[#allocation2 + $0x30] sm:$0xff] %vm163, %v1510
  %1513 = vmatprep.subr.bf16.mxu0 0
  %1514 = vmatpush1.bf16.msra.mxu0 0
  %1515 = vmatprep.subr.bf16.mxu0 0
  %1516 = vmatpush1.bf16.msra.mxu0 0
  %1517 = vmatprep.subr.bf16.mxu0 0
  %1518 = vmatpush1.bf16.msra.mxu0 0
  %1519 = vmatprep.subr.bf16.mxu0 0
  %1520 = vmatpush1.bf16.msra.mxu0 0
  %1521 = vmatprep.subr.bf16.mxu0 0
  %1522 = vmatpush1.bf16.msra.mxu0 0
  %1523 = vmatprep.subr.bf16.mxu0 0
  %1524 = vmatpush1.bf16.msra.mxu0 0
  %1525 = vmatprep.subr.bf16.mxu0 0
  %1526 = vmatpush1.bf16.msra.mxu0 %v160
  %1527 = vmatprep.subr.bf16.mxu0 0
  %1528 = vmatpush1.bf16.msra.mxu0 %v159
  %1529 = vmatprep.subr.bf16.mxu0 0
  %1530 = vmatpush2.bf16.msra.mxu0 0
  %1531 = vmatprep.subr.bf16.mxu0 0
  %1532 = vmatpush2.bf16.msra.mxu0 0
  %1533 = vmatprep.subr.bf16.mxu0 0
  %1534 = vmatpush2.bf16.msra.mxu0 0
  %1535 = vmatprep.subr.bf16.mxu0 0
  %1536 = vmatpush2.bf16.msra.mxu0 0
  %1537 = vmatprep.subr.bf16.mxu0 0
  %1538 = vmatpush2.bf16.msra.mxu0 0
  %1539 = vmatprep.subr.bf16.mxu0 0
  %1540 = vmatpush2.bf16.msra.mxu0 0
  %1541 = vmatprep.subr.bf16.mxu0 0
  %1542 = vmatpush2.bf16.msra.mxu0 0
  %1543 = vmatprep.subr.bf16.mxu0 0
  %1544 = vmatpush2.bf16.msra.mxu0 0
  %1545 = vmatprep.mubr.bf16.mxu0 0
  %1546 = vmatmul.mubr.bf16.gmra.mxu0 %v1394
  %v1547 = vpop.f32.mrf.mxu0
  %v1548 = vadd.f32 0.0, %v1547
  %v1549 = vpop.f32.mrf.mxu0
  %v1550 = vpop.f32.mrf.mxu0
  %v1551 = vpop.f32.mrf.mxu0
  %1552 = vdwg.mxu0
  %v1553 = vadd.f32 %v148, %v1548
  %v1554 = vxor.u32 %v1553, 2147483648
  %v1555 = vmul.f32 %v1554, 1.442695
  %v1556 = vpow.pop %v1555
  %v1557 = vadd.f32 %v1556, 1.0
  %v1558 = vrcp.pop %v1557
  %v1559 = vmul.f32 1.0, %v1558
  %v1560 = vtanh.pop %v1553
  %v1561 = vmul.f32 %v1559, %v1382
  %1563 = vrot.lane.b32.xlu0 %v1560, 32
  %v1564 = vpop.permute.xlu0 %1563
  %v1566 = vmul.f32 %v1559, %v1564
  %1568 = vrot.lane.b32.xlu0 %v1566, 32
  %v1569 = vpop.permute.xlu0 %1568
  %v1571 = vadd.f32 %v1561, %v1569
  %v1572 = vtanh.pop %v1571
  %1574 = vrot.lane.b32.xlu0 %v1572, 32
  %v1575 = vpop.permute.xlu0 %1574
  %v1577 = vmul.f32 %v1559, %v1575
  %v1578 = vpack.c.bf16 %v1577, %v1577
  %1580 = vrot.lane.b32.xlu0 %v1578, 64
  %v1581 = vpop.permute.xlu0 %1580
  %v1583 = vsel %vm163, %v1581, 0
  %1585 = vmatprep.subr.bf16.mxu0 0
  %1586 = vmatpush1.bf16.msra.mxu0 0
  %1587 = vmatprep.subr.bf16.mxu0 0
  %1588 = vmatpush1.bf16.msra.mxu0 0
  %1589 = vmatprep.subr.bf16.mxu0 0
  %1590 = vmatpush1.bf16.msra.mxu0 0
  %1591 = vmatprep.subr.bf16.mxu0 0
  %1592 = vmatpush1.bf16.msra.mxu0 0
  %1593 = vmatprep.subr.bf16.mxu0 0
  %1594 = vmatpush1.bf16.msra.mxu0 0
  %1595 = vmatprep.subr.bf16.mxu0 0
  %1596 = vmatpush1.bf16.msra.mxu0 0
  %1597 = vmatprep.subr.bf16.mxu0 0
  %1598 = vmatpush1.bf16.msra.mxu0 %v251
  %1599 = vmatprep.subr.bf16.mxu0 0
  %1600 = vmatpush1.bf16.msra.mxu0 %v250
  %1601 = vmatprep.subr.bf16.mxu0 0
  %1602 = vmatpush2.bf16.msra.mxu0 0
  %1603 = vmatprep.subr.bf16.mxu0 0
  %1604 = vmatpush2.bf16.msra.mxu0 0
  %1605 = vmatprep.subr.bf16.mxu0 0
  %1606 = vmatpush2.bf16.msra.mxu0 0
  %1607 = vmatprep.subr.bf16.mxu0 0
  %1608 = vmatpush2.bf16.msra.mxu0 0
  %1609 = vmatprep.subr.bf16.mxu0 0
  %1610 = vmatpush2.bf16.msra.mxu0 0
  %1611 = vmatprep.subr.bf16.mxu0 0
  %1612 = vmatpush2.bf16.msra.mxu0 0
  %1613 = vmatprep.subr.bf16.mxu0 0
  %1614 = vmatpush2.bf16.msra.mxu0 0
  %1615 = vmatprep.subr.bf16.mxu0 0
  %1616 = vmatpush2.bf16.msra.mxu0 0
  %1617 = vmatprep.mubr.bf16.mxu0 0
  %1618 = vmatmul.mubr.bf16.gmra.mxu0 %v1583
  %v1619 = vpop.f32.mrf.mxu0
  %v1620 = vadd.f32 %v237, %v1619
  %v1621 = vpop.f32.mrf.mxu0
  %v1622 = vpop.f32.mrf.mxu0
  %v1623 = vpop.f32.mrf.mxu0
  %1624 = vdwg.mxu0
  %v1625 = vpack.c.bf16 %v1507, %v1507
  %1627 = vrot.lane.b32.xlu0 %v1625, 64
  %v1628 = vpop.permute.xlu0 %1627
  %v1630 = vsel %vm163, %v1628, 0
  %1632 = vmatprep.subr.bf16.mxu0 0
  %1633 = vmatpush1.bf16.msra.mxu0 0
  %1634 = vmatprep.subr.bf16.mxu0 0
  %1635 = vmatpush1.bf16.msra.mxu0 0
  %1636 = vmatprep.subr.bf16.mxu0 0
  %1637 = vmatpush1.bf16.msra.mxu0 0
  %1638 = vmatprep.subr.bf16.mxu0 0
  %1639 = vmatpush1.bf16.msra.mxu0 0
  %1640 = vmatprep.subr.bf16.mxu0 0
  %1641 = vmatpush1.bf16.msra.mxu0 0
  %1642 = vmatprep.subr.bf16.mxu0 0
  %1643 = vmatpush1.bf16.msra.mxu0 0
  %1644 = vmatprep.subr.bf16.mxu0 0
  %1645 = vmatpush1.bf16.msra.mxu0 %v306
  %1646 = vmatprep.subr.bf16.mxu0 0
  %1647 = vmatpush1.bf16.msra.mxu0 %v305
  %1648 = vmatprep.subr.bf16.mxu0 0
  %1649 = vmatpush2.bf16.msra.mxu0 0
  %1650 = vmatprep.subr.bf16.mxu0 0
  %1651 = vmatpush2.bf16.msra.mxu0 0
  %1652 = vmatprep.subr.bf16.mxu0 0
  %1653 = vmatpush2.bf16.msra.mxu0 0
  %1654 = vmatprep.subr.bf16.mxu0 0
  %1655 = vmatpush2.bf16.msra.mxu0 0
  %1656 = vmatprep.subr.bf16.mxu0 0
  %1657 = vmatpush2.bf16.msra.mxu0 0
  %1658 = vmatprep.subr.bf16.mxu0 0
  %1659 = vmatpush2.bf16.msra.mxu0 0
  %1660 = vmatprep.subr.bf16.mxu0 0
  %1661 = vmatpush2.bf16.msra.mxu0 0
  %1662 = vmatprep.subr.bf16.mxu0 0
  %1663 = vmatpush2.bf16.msra.mxu0 0
  %1664 = vmatprep.mubr.bf16.mxu0 0
  %1665 = vmatmul.mubr.bf16.gmra.mxu0 %v1630
  %v1666 = vpop.f32.mrf.mxu0
  %v1667 = vadd.f32 0.0, %v1666
  %v1668 = vpop.f32.mrf.mxu0
  %v1669 = vpop.f32.mrf.mxu0
  %v1670 = vpop.f32.mrf.mxu0
  %1671 = vdwg.mxu0
  %v1672 = vadd.f32 %v1620, %v1667
  %v1673 = vxor.u32 %v1672, 2147483648
  %v1674 = vmul.f32 %v1673, 1.442695
  %v1675 = vpow.pop %v1674
  %v1676 = vadd.f32 %v1675, 1.0
  %v1677 = vrcp.pop %v1676
  %v1678 = vmul.f32 1.0, %v1677
  %v1679 = vtanh.pop %v1672
  %v1680 = vmul.f32 %v1678, %v1501
  %1682 = vrot.lane.b32.xlu0 %v1679, 32
  %v1683 = vpop.permute.xlu0 %1682
  %v1685 = vmul.f32 %v1678, %v1683
  %1687 = vrot.lane.b32.xlu0 %v1685, 32
  %v1688 = vpop.permute.xlu0 %1687
  %v1690 = vadd.f32 %v1680, %v1688
  %v1691 = vtanh.pop %v1690
  %1693 = vrot.lane.b32.xlu0 %v1691, 32
  %v1694 = vpop.permute.xlu0 %1693
  %v1696 = vmul.f32 %v1678, %v1694
  %1698 = vrot.lane.b32.xlu0 %v1696, 64
  %v1699 = vpop.permute.xlu0 %1698
  %1701 = vst.msk [vmem:[#allocation2 + $0x38] sm:$0xff] %vm163, %v1699
  %v1702 = vld [vmem:[#allocation2] sm:$0xff]
  %v1703 = vld [vmem:[#allocation2 + $0x8] sm:$0xff]
  %v1704 = vld [vmem:[#allocation2 + $0x10] sm:$0xff]
  %v1705 = vld [vmem:[#allocation2 + $0x18] sm:$0xff]
  %v1706 = vld [vmem:[#allocation2 + $0x20] sm:$0xff]
  %v1707 = vld [vmem:[#allocation2 + $0x28] sm:$0xff]
  %v1708 = vld [vmem:[#allocation2 + $0x30] sm:$0xff]
  %v1709 = vld [vmem:[#allocation2 + $0x38] sm:$0xff]
  %v1710 = vpack.c.bf16 %v1703, %v1702
  %v1711 = vpack.c.bf16 %v1705, %v1704
  %v1712 = vpack.c.bf16 %v1707, %v1706
  %v1713 = vpack.c.bf16 %v1709, %v1708
  %v1714 = vld [vmem:[%s7] sm:$0xf]
  %v1715 = vld [vmem:[%s7 + $0x4] sm:$0xf]
  %v1716 = vld [vmem:[%s7 + $0x8] sm:$0xf]
  %v1717 = vld [vmem:[%s7 + $0xc] sm:$0xf]
  %v1718 = vld [vmem:[%s8] sm:$0x1]
  %v1720 = vlaneseq
  %v1721 = vshrl.u32 %v1720, 7
  %v1722 = vsub.s32 0, %v1721
  %v1723 = vrot.slane %v1718, %v1722
  %v1729 = vunpack.c.l.b16 %v1714
  %v1730 = vunpack.c.l.b16 %v1715
  %v1731 = vunpack.c.l.b16 %v1716
  %v1732 = vunpack.c.l.b16 %v1717
  %v1733 = vpack.c.b16 %v1730, %v1729
  %v1734 = vpack.c.b16 %v1732, %v1731
  %v1738 = vsel %vm163, %v1710, 0
  %v1741 = vsel %vm163, %v1711, 0
  %v1744 = vsel %vm163, %v1712, 0
  %v1747 = vsel %vm163, %v1713, 0
  %1749 = vmatprep.subr.bf16.mxu0 0
  %1750 = vmatpush1.bf16.msra.mxu0 0
  %1751 = vmatprep.subr.bf16.mxu0 0
  %1752 = vmatpush1.bf16.msra.mxu0 0
  %1753 = vmatprep.subr.bf16.mxu0 0
  %1754 = vmatpush1.bf16.msra.mxu0 0
  %1755 = vmatprep.subr.bf16.mxu0 0
  %1756 = vmatpush1.bf16.msra.mxu0 0
  %1757 = vmatprep.subr.bf16.mxu0 0
  %1758 = vmatpush1.bf16.msra.mxu0 0
  %1759 = vmatprep.subr.bf16.mxu0 0
  %1760 = vmatpush1.bf16.msra.mxu0 0
  %1761 = vmatprep.subr.bf16.mxu0 0
  %1762 = vmatpush1.bf16.msra.mxu0 %v1734
  %1763 = vmatprep.subr.bf16.mxu0 0
  %1764 = vmatpush1.bf16.msra.mxu0 %v1733
  %1765 = vmatprep.subr.bf16.mxu0 0
  %1766 = vmatpush2.bf16.msra.mxu0 0
  %1767 = vmatprep.subr.bf16.mxu0 0
  %1768 = vmatpush2.bf16.msra.mxu0 0
  %1769 = vmatprep.subr.bf16.mxu0 0
  %1770 = vmatpush2.bf16.msra.mxu0 0
  %1771 = vmatprep.subr.bf16.mxu0 0
  %1772 = vmatpush2.bf16.msra.mxu0 0
  %1773 = vmatprep.subr.bf16.mxu0 0
  %1774 = vmatpush2.bf16.msra.mxu0 0
  %1775 = vmatprep.subr.bf16.mxu0 0
  %1776 = vmatpush2.bf16.msra.mxu0 0
  %1777 = vmatprep.subr.bf16.mxu0 0
  %1778 = vmatpush2.bf16.msra.mxu0 0
  %1779 = vmatprep.subr.bf16.mxu0 0
  %1780 = vmatpush2.bf16.msra.mxu0 0
  %1781 = vmatprep.mubr.bf16.mxu0 0
  %1782 = vmatmul.mubr.bf16.gmra.mxu0 %v1738
  %v1783 = vpop.f32.mrf.mxu0
  %v1784 = vadd.f32 %v1723, %v1783
  %v1785 = vpop.f32.mrf.mxu0
  %v1786 = vpop.f32.mrf.mxu0
  %v1787 = vadd.f32 %v1723, %v1786
  %v1788 = vpop.f32.mrf.mxu0
  %1789 = vmatprep.mubr.bf16.mxu0 0
  %1790 = vmatmul.mubr.bf16.gmra.mxu0 %v1741
  %v1791 = vpop.f32.mrf.mxu0
  %v1792 = vadd.f32 %v1723, %v1791
  %v1793 = vpop.f32.mrf.mxu0
  %v1794 = vpop.f32.mrf.mxu0
  %v1795 = vadd.f32 %v1723, %v1794
  %v1796 = vpop.f32.mrf.mxu0
  %1797 = vmatprep.mubr.bf16.mxu0 0
  %1798 = vmatmul.mubr.bf16.gmra.mxu0 %v1744
  %v1799 = vpop.f32.mrf.mxu0
  %v1800 = vadd.f32 %v1723, %v1799
  %v1801 = vpop.f32.mrf.mxu0
  %v1802 = vpop.f32.mrf.mxu0
  %v1803 = vadd.f32 %v1723, %v1802
  %v1804 = vpop.f32.mrf.mxu0
  %1805 = vmatprep.mubr.bf16.mxu0 0
  %1806 = vmatmul.mubr.bf16.gmra.mxu0 %v1747
  %v1807 = vpop.f32.mrf.mxu0
  %v1808 = vadd.f32 %v1723, %v1807
  %v1809 = vpop.f32.mrf.mxu0
  %v1810 = vpop.f32.mrf.mxu0
  %v1811 = vadd.f32 %v1723, %v1810
  %v1812 = vpop.f32.mrf.mxu0
  %1813 = vdwg.mxu0
  %1814 = vst [vmem:[%s9] sm:$0xff] %v1784
  %1815 = vst [vmem:[%s9 + $0x8] sm:$0xff] %v1787
  %1816 = vst [vmem:[%s9 + $0x10] sm:$0xff] %v1792
  %1817 = vst [vmem:[%s9 + $0x18] sm:$0xff] %v1795
  %1818 = vst [vmem:[%s9 + $0x20] sm:$0xff] %v1800
  %1819 = vst [vmem:[%s9 + $0x28] sm:$0xff] %v1803
  %1820 = vst [vmem:[%s9 + $0x30] sm:$0xff] %v1808
  %1821 = vst [vmem:[%s9 + $0x38] sm:$0xff] %v1811
  // Predicated region
  $region38: #{lstm_model_forward.1} parent=0 // pred_check
    _
  $region39: #{lstm_model_forward.1} parent=0 // pred_check_branch
    %1823 = sbr.rel (0) target = $region41
  $region40: #{lstm_model_forward.1} parent=0 // pred_region
    _
  $region41: #{lstm_model_forward.1} parent=0 // pred_fallthru
    _
  // Predicated region
  $region42: #{lstm_model_forward.1} parent=0 // pred_check
    _
  $region43: #{lstm_model_forward.1} parent=0 // pred_check_branch
    %1825 = sbr.rel (0) target = $region45
  $region44: #{lstm_model_forward.1} parent=0 // pred_region
    _
  $region45: #{lstm_model_forward.1} parent=0 // pred_fallthru
    _

</llo_original>
